<compile_context>
chip_gen: v5e
topology: v5e:2x2
jax: 0.10.0
libtpu: 0.0.40
codegen_flags: <defaults>
</compile_context>

<pallas_src>
import jax
import jax.numpy as jnp
from jax.experimental import pallas as pl
from jax.experimental.pallas import tpu as pltpu

BN_EPS = 1e-5
LANE = 128


def _round_up(x, m):
    return (x + m - 1) // m * m


def _pick_tn(n_pad, tn_max):
    """Largest multiple of 128 that divides n_pad and is <= tn_max."""
    best = LANE
    t = LANE
    while t <= min(tn_max, n_pad):
        if n_pad % t == 0:
            best = t
        t += LANE
    return best


def _make_fused_kernel(layer_meta, n_layers):
    """layer_meta: list of (K_pad, N_pad, tn, has_bn) -- all Python-static."""
    # Flat, static DMA schedule over (layer, weight column tile).
    sched = []
    for l, (K, N, tn, _) in enumerate(layer_meta):
        for t in range(N // tn):
            sched.append((l, t, K, tn))
    n_steps = len(sched)

    def kernel(x_ref, bgb_ref, *rest):
        w_refs = rest[:n_layers]          # per-layer HBM weight refs (bf16)
        out_ref = rest[n_layers]          # (B, N_last) f32, VMEM
        act_ref = rest[n_layers + 1]      # (2, B, n_max) bf16 ping-pong scratch
        wbuf = rest[n_layers + 2]         # (2, k_max, tn_max) bf16 double buffer
        sem = rest[n_layers + 3]          # DMA semaphores (2,)

        def dma(step, slot):
            l, t, K, tn = sched[step]
            return pltpu.make_async_copy(
                w_refs[l].at[:, t * tn:(t + 1) * tn],
                wbuf.at[slot, :K, :tn],
                sem.at[slot])

        dma(0, 0).start()                 # prime the weight pipeline
        step = 0
        for l, (K, N, tn, has_bn) in enumerate(layer_meta):
            # LHS: padded input for layer 0, else previous layer's bf16 output.
            lhs = x_ref[...] if l == 0 else act_ref[(l - 1) % 2, :, :K]
            for t in range(N // tn):
                slot = step % 2
                if step + 1 < n_steps:    # prefetch next tile (may cross layers)
                    dma(step + 1, 1 - slot).start()
                dma(step, slot).wait()

                y = jnp.dot(lhs, wbuf[slot, :K, :tn],
                            preferred_element_type=jnp.float32)
                # Resident bias/gamma/beta table, 8-row (sublane-aligned) block
                # per layer: rows 0/1/2 = bias/gamma/beta.
                bgb = bgb_ref[8 * l:8 * l + 8, t * tn:(t + 1) * tn]
                y = y + bgb[0:1, :]
                if has_bn:
                    # ReLU then BatchNorm1d (training mode, biased variance).
                    y = jnp.maximum(y, 0.0)
                    mean = jnp.mean(y, axis=0, keepdims=True)
                    var = jnp.mean((y - mean) * (y - mean), axis=0,
                                   keepdims=True)
                    y = (y - mean) * jax.lax.rsqrt(var + BN_EPS)
                    y = y * bgb[1:2, :] + bgb[2:3, :]
                if l == n_layers - 1:
                    out_ref[:, t * tn:(t + 1) * tn] = y.astype(out_ref.dtype)
                else:
                    act_ref[l % 2, :, t * tn:(t + 1) * tn] = (
                        y.astype(act_ref.dtype))
                step += 1

    return kernel


def autoencoder_forward(x, params, out_dim, *, tn_max=512):
    """Fused encoder+decoder forward.

    params: list of (w [K_pad, N_pad] bf16, bgb [3, N_pad] f32, has_bn).
    """
    B, d = x.shape
    n_layers = len(params)

    layer_meta = []
    for (w, _, has_bn) in params:
        K, N = w.shape
        layer_meta.append((K, N, _pick_tn(N, tn_max), bool(has_bn)))

    k_max = max(m[0] for m in layer_meta)
    n_max = max(m[1] for m in layer_meta)
    tn_big = max(m[2] for m in layer_meta)
    n_last = layer_meta[-1][1]
    k0 = layer_meta[0][0]

    # Fused, fully-resident bias/gamma/beta table: (8 * n_layers, n_max).
    blocks = []
    for (_, bgb, _) in params:
        blk = jnp.zeros((8, n_max), jnp.float32).at[:3, :bgb.shape[1]].set(bgb)
        blocks.append(blk)
    bgb_all = jnp.concatenate(blocks, axis=0)

    x_pad = jnp.pad(x, ((0, 0), (0, k0 - d))).astype(jnp.bfloat16)

    # VMEM budget: weight double-buffer + act ping-pong + x + bgb + output.
    vmem_needed = (2 * k_max * tn_big * 2 + 2 * B * n_max * 2 + B * k0 * 2
                   + 8 * n_layers * n_max * 4 + B * n_last * 4)
    vmem_limit = max(2 * vmem_needed, 16 * 1024 * 1024)
    try:  # refine with the actual chip's VMEM capacity when queryable
        cap = getattr(pltpu.get_tpu_info(), "vmem_capacity_bytes", None)
        if cap:
            vmem_limit = min(vmem_limit, int(cap) * 3 // 4)
    except Exception:
        pass
    vmem_limit = int(min(vmem_limit, 48 * 1024 * 1024))

    kernel = _make_fused_kernel(layer_meta, n_layers)
    out = pl.pallas_call(
        kernel,
        out_shape=jax.ShapeDtypeStruct((B, n_last), jnp.float32),
        in_specs=(
            [pl.BlockSpec(memory_space=pltpu.MemorySpace.VMEM),   # x, resident
             pl.BlockSpec(memory_space=pltpu.MemorySpace.VMEM)]   # bgb table
            + [pl.BlockSpec(memory_space=pl.ANY)] * n_layers      # weights: HBM
        ),
        out_specs=pl.BlockSpec(memory_space=pltpu.MemorySpace.VMEM),
        scratch_shapes=[
            pltpu.VMEM((2, B, n_max), jnp.bfloat16),        # activation ping-pong
            pltpu.VMEM((2, k_max, tn_big), jnp.bfloat16),   # weight double buffer
            pltpu.SemaphoreType.DMA((2,)),
        ],
        compiler_params=pltpu.CompilerParams(vmem_limit_bytes=vmem_limit),
    )(x_pad, bgb_all, *[w for (w, _, _) in params])
    return out[:, :out_dim]


def init_params(key, layer_dims):
    """PyTorch-style deterministic init. layer_dims: list of (in, out, has_bn).

    Feature dims are zero-padded to multiples of 128; zero-padded weight
    rows/cols plus zero bias/gamma/beta keep padded features exactly 0 through
    Linear + ReLU + BN, so real outputs are unaffected.
    """
    params = []
    for i, (fan_in, fan_out, has_bn) in enumerate(layer_dims):
        kw, kb = jax.random.split(jax.random.fold_in(key, i))
        bound = 1.0 / (fan_in ** 0.5)
        w = jax.random.uniform(kw, (fan_in, fan_out), jnp.float32, -bound, bound)
        b = jax.random.uniform(kb, (fan_out,), jnp.float32, -bound, bound)
        gamma = jnp.ones((fan_out,), jnp.float32)
        beta = jnp.zeros((fan_out,), jnp.float32)

        k_pad = _round_up(fan_in, LANE)
        n_pad = _round_up(fan_out, LANE)
        w = jnp.pad(w, ((0, k_pad - fan_in), (0, n_pad - fan_out)))
        b = jnp.pad(b, (0, n_pad - fan_out))
        gamma = jnp.pad(gamma, (0, n_pad - fan_out))
        beta = jnp.pad(beta, (0, n_pad - fan_out))
        bgb = jnp.stack([b, gamma, beta], axis=0)  # (3, n_pad) f32

        params.append((w.astype(jnp.bfloat16), bgb, has_bn))
    return params


if __name__ == "__main__":
    # Scaled-down version of input_dim=4000, hidden 2000/1000, encoding_dim=1000.
    # Non-multiple-of-128 dims on purpose to exercise the lane-padding path
    # (400->512, 200->256, 100->128), mirroring 4000->4096 etc. at full scale.
    B, IN_DIM, H1, H2, ENC = 8, 400, 200, 100, 100

    layer_dims = [
        # encoder: Linear + ReLU + BatchNorm1d each
        (IN_DIM, H1, True),
        (H1, H2, True),
        (H2, ENC, True),
        # decoder: last Linear has no ReLU / no BN
        (ENC, H2, True),
        (H2, H1, True),
        (H1, IN_DIM, False),
    ]

    key = jax.random.PRNGKey(0)
    kx, kp = jax.random.split(key)
    x = jax.random.normal(kx, (B, IN_DIM), dtype=jnp.float32)
    params = init_params(kp, layer_dims)

    out = autoencoder_forward(x, params, IN_DIM)
    out = jax.block_until_ready(out)
    assert out.shape == (B, IN_DIM), out.shape

    # Pure-JAX reference with identical (padded, bf16-weight / bf16-activation)
    # semantics. Note: results deliberately deviate from a float32 PyTorch
    # Linear at the bf16 level; BN uses training-mode batch statistics.
    def ref_forward(x, params, out_dim):
        in_pad = params[0][0].shape[0]
        y = jnp.pad(x, ((0, 0), (0, in_pad - x.shape[1])))
        for (w, bgb, has_bn) in params:
            y = jnp.dot(y.astype(jnp.bfloat16), w,
                        preferred_element_type=jnp.float32) + bgb[0]
            if has_bn:
                y = jnp.maximum(y, 0.0)
                mean = jnp.mean(y, axis=0, keepdims=True)
                var = jnp.mean((y - mean) ** 2, axis=0, keepdims=True)
                y = (y - mean) * jax.lax.rsqrt(var + BN_EPS) * bgb[1] + bgb[2]
        return y[:, :out_dim]

    ref = ref_forward(x, params, IN_DIM)
    err = float(jnp.max(jnp.abs(out - ref)))
    assert jnp.allclose(out, ref, atol=2e-2, rtol=2e-2), err

    print("KERNEL_OK")
</pallas_src>

<mosaic_0001>
module attributes {stable_mosaic.version = 11 : i64} {
  func.func @kernel(%arg0: memref<8x512xbf16, #tpu.memory_space<vmem>>, %arg1: memref<48x512xf32, #tpu.memory_space<vmem>>, %arg2: memref<512x256xbf16, #tpu.memory_space<any>>, %arg3: memref<256x128xbf16, #tpu.memory_space<any>>, %arg4: memref<128x128xbf16, #tpu.memory_space<any>>, %arg5: memref<128x128xbf16, #tpu.memory_space<any>>, %arg6: memref<128x256xbf16, #tpu.memory_space<any>>, %arg7: memref<256x512xbf16, #tpu.memory_space<any>>, %arg8: memref<8x512xf32, #tpu.memory_space<vmem>>, %arg9: memref<2x8x512xbf16, #tpu.memory_space<vmem>>, %arg10: memref<2x512x512xbf16, #tpu.memory_space<vmem>>, %arg11: memref<2x!tpu.dma_semaphore, #tpu.memory_space<semaphore_mem>>) attributes {dimension_semantics = [], scalar_prefetch = 0 : i64, scratch_operands = 3 : i64, tpu.core_type = #tpu.core_type<tc>} {
    %c0_i32 = arith.constant 0 : i32
    %c0_i32_0 = arith.constant 0 : i32
    %c0_i32_1 = arith.constant 0 : i32
    %c0_i32_2 = arith.constant 0 : i32
    %0 = tpu.memref_slice %arg2[%c0_i32_1, %c0_i32_2] : memref<512x256xbf16, #tpu.memory_space<any>> -> memref<512x256xbf16, #tpu.memory_space<any>>
    %c0_i32_3 = arith.constant 0 : i32
    %c0_i32_4 = arith.constant 0 : i32
    %1 = tpu.memref_slice %arg10[%c0_i32, %c0_i32_3, %c0_i32_4] : memref<2x512x512xbf16, #tpu.memory_space<vmem>> -> memref<1x512x256xbf16, #tpu.memory_space<vmem>>
    %2 = tpu.memref_squeeze %1 : memref<1x512x256xbf16, #tpu.memory_space<vmem>> -> memref<512x256xbf16, #tpu.memory_space<vmem>>
    %3 = tpu.memref_slice %arg11[%c0_i32_0] : memref<2x!tpu.dma_semaphore, #tpu.memory_space<semaphore_mem>> -> memref<1x!tpu.dma_semaphore, #tpu.memory_space<semaphore_mem>>
    %4 = tpu.memref_squeeze %3 : memref<1x!tpu.dma_semaphore, #tpu.memory_space<semaphore_mem>> -> memref<!tpu.dma_semaphore, #tpu.memory_space<semaphore_mem>>
    tpu.enqueue_dma source(%0 : memref<512x256xbf16, #tpu.memory_space<any>>) target(%2 : memref<512x256xbf16, #tpu.memory_space<vmem>>) target_semaphore(%4 : memref<!tpu.dma_semaphore, #tpu.memory_space<semaphore_mem>>)
    %c0 = arith.constant 0 : index
    %c0_5 = arith.constant 0 : index
    %5 = vector.load %arg0[%c0, %c0_5] : memref<8x512xbf16, #tpu.memory_space<vmem>>, vector<8x512xbf16>
    %c1_i32 = arith.constant 1 : i32
    %c1_i32_6 = arith.constant 1 : i32
    %c0_i32_7 = arith.constant 0 : i32
    %c0_i32_8 = arith.constant 0 : i32
    %6 = tpu.memref_slice %arg3[%c0_i32_7, %c0_i32_8] : memref<256x128xbf16, #tpu.memory_space<any>> -> memref<256x128xbf16, #tpu.memory_space<any>>
    %c0_i32_9 = arith.constant 0 : i32
    %c0_i32_10 = arith.constant 0 : i32
    %7 = tpu.memref_slice %arg10[%c1_i32, %c0_i32_9, %c0_i32_10] : memref<2x512x512xbf16, #tpu.memory_space<vmem>> -> memref<1x256x128xbf16, #tpu.memory_space<vmem>>
    %8 = tpu.memref_squeeze %7 : memref<1x256x128xbf16, #tpu.memory_space<vmem>> -> memref<256x128xbf16, #tpu.memory_space<vmem>>
    %9 = tpu.memref_slice %arg11[%c1_i32_6] : memref<2x!tpu.dma_semaphore, #tpu.memory_space<semaphore_mem>> -> memref<1x!tpu.dma_semaphore, #tpu.memory_space<semaphore_mem>>
    %10 = tpu.memref_squeeze %9 : memref<1x!tpu.dma_semaphore, #tpu.memory_space<semaphore_mem>> -> memref<!tpu.dma_semaphore, #tpu.memory_space<semaphore_mem>>
    tpu.enqueue_dma source(%6 : memref<256x128xbf16, #tpu.memory_space<any>>) target(%8 : memref<256x128xbf16, #tpu.memory_space<vmem>>) target_semaphore(%10 : memref<!tpu.dma_semaphore, #tpu.memory_space<semaphore_mem>>)
    %c0_i32_11 = arith.constant 0 : i32
    %c0_i32_12 = arith.constant 0 : i32
    %c0_i32_13 = arith.constant 0 : i32
    %c0_i32_14 = arith.constant 0 : i32
    %11 = tpu.memref_slice %arg2[%c0_i32_13, %c0_i32_14] : memref<512x256xbf16, #tpu.memory_space<any>> -> memref<512x256xbf16, #tpu.memory_space<any>>
    %c0_i32_15 = arith.constant 0 : i32
    %c0_i32_16 = arith.constant 0 : i32
    %12 = tpu.memref_slice %arg10[%c0_i32_11, %c0_i32_15, %c0_i32_16] : memref<2x512x512xbf16, #tpu.memory_space<vmem>> -> memref<1x512x256xbf16, #tpu.memory_space<vmem>>
    %13 = tpu.memref_squeeze %12 : memref<1x512x256xbf16, #tpu.memory_space<vmem>> -> memref<512x256xbf16, #tpu.memory_space<vmem>>
    %14 = tpu.memref_slice %arg11[%c0_i32_12] : memref<2x!tpu.dma_semaphore, #tpu.memory_space<semaphore_mem>> -> memref<1x!tpu.dma_semaphore, #tpu.memory_space<semaphore_mem>>
    %15 = tpu.memref_squeeze %14 : memref<1x!tpu.dma_semaphore, #tpu.memory_space<semaphore_mem>> -> memref<!tpu.dma_semaphore, #tpu.memory_space<semaphore_mem>>
    tpu.wait_dma2 semaphore(%15 : memref<!tpu.dma_semaphore, #tpu.memory_space<semaphore_mem>>) src(%11 : memref<512x256xbf16, #tpu.memory_space<any>>) dst(%13 : memref<512x256xbf16, #tpu.memory_space<vmem>>)
    %c0_17 = arith.constant 0 : index
    %c0_18 = arith.constant 0 : index
    %c0_19 = arith.constant 0 : index
    %16 = vector.load %arg10[%c0_17, %c0_18, %c0_19] : memref<2x512x512xbf16, #tpu.memory_space<vmem>>, vector<1x512x256xbf16>
    %17 = vector.shape_cast %16 : vector<1x512x256xbf16> to vector<512x256xbf16>
    %cst = arith.constant dense<0.000000e+00> : vector<8x256xf32>
    %18 = tpu.matmul %5, %17, %cst {dimension_numbers = #tpu.dot_dimension_numbers<[1], [0], [0], [1], [0, 0, 1, 1], [], []>} : vector<8x512xbf16>, vector<512x256xbf16>, vector<8x256xf32> -> vector<8x256xf32>
    %c0_20 = arith.constant 0 : index
    %c0_21 = arith.constant 0 : index
    %19 = vector.load %arg1[%c0_20, %c0_21] : memref<48x512xf32, #tpu.memory_space<vmem>>, vector<8x256xf32>
    %20 = vector.extract_strided_slice %19 {offsets = [0, 0], sizes = [1, 256], strides = [1, 1]} : vector<8x256xf32> to vector<1x256xf32>
    %21 = vector.broadcast %20 : vector<1x256xf32> to vector<8x256xf32>
    %22 = arith.addf %18, %21 : vector<8x256xf32>
    %cst_22 = arith.constant 0.000000e+00 : f32
    %23 = vector.broadcast %cst_22 : f32 to vector<8x256xf32>
    %24 = arith.maximumf %22, %23 : vector<8x256xf32>
    %cst_23 = arith.constant dense<0.000000e+00> : vector<256xf32>
    %25 = vector.multi_reduction <add>, %24, %cst_23 [0] : vector<8x256xf32> to vector<256xf32>
    %26 = vector.shape_cast %25 : vector<256xf32> to vector<1x256xf32>
    %cst_24 = arith.constant 8.000000e+00 : f32
    %27 = vector.broadcast %cst_24 : f32 to vector<1x256xf32>
    %28 = arith.divf %26, %27 : vector<1x256xf32>
    %29 = vector.broadcast %28 : vector<1x256xf32> to vector<8x256xf32>
    %30 = arith.subf %24, %29 : vector<8x256xf32>
    %31 = vector.broadcast %28 : vector<1x256xf32> to vector<8x256xf32>
    %32 = arith.subf %24, %31 : vector<8x256xf32>
    %33 = arith.mulf %30, %32 : vector<8x256xf32>
    %cst_25 = arith.constant dense<0.000000e+00> : vector<256xf32>
    %34 = vector.multi_reduction <add>, %33, %cst_25 [0] : vector<8x256xf32> to vector<256xf32>
    %35 = vector.shape_cast %34 : vector<256xf32> to vector<1x256xf32>
    %cst_26 = arith.constant 8.000000e+00 : f32
    %36 = vector.broadcast %cst_26 : f32 to vector<1x256xf32>
    %37 = arith.divf %35, %36 : vector<1x256xf32>
    %38 = vector.broadcast %28 : vector<1x256xf32> to vector<8x256xf32>
    %39 = arith.subf %24, %38 : vector<8x256xf32>
    %cst_27 = arith.constant 9.99999974E-6 : f32
    %40 = vector.broadcast %cst_27 : f32 to vector<1x256xf32>
    %41 = arith.addf %37, %40 : vector<1x256xf32>
    %42 = math.rsqrt %41 : vector<1x256xf32>
    %43 = vector.broadcast %42 : vector<1x256xf32> to vector<8x256xf32>
    %44 = arith.mulf %39, %43 : vector<8x256xf32>
    %45 = vector.extract_strided_slice %19 {offsets = [1, 0], sizes = [1, 256], strides = [1, 1]} : vector<8x256xf32> to vector<1x256xf32>
    %46 = vector.broadcast %45 : vector<1x256xf32> to vector<8x256xf32>
    %47 = arith.mulf %44, %46 : vector<8x256xf32>
    %48 = vector.extract_strided_slice %19 {offsets = [2, 0], sizes = [1, 256], strides = [1, 1]} : vector<8x256xf32> to vector<1x256xf32>
    %49 = vector.broadcast %48 : vector<1x256xf32> to vector<8x256xf32>
    %50 = arith.addf %47, %49 : vector<8x256xf32>
    %51 = arith.truncf %50 : vector<8x256xf32> to vector<8x256xbf16>
    %c0_28 = arith.constant 0 : index
    %c0_29 = arith.constant 0 : index
    %c0_30 = arith.constant 0 : index
    %52 = vector.load %arg9[%c0_28, %c0_29, %c0_30] : memref<2x8x512xbf16, #tpu.memory_space<vmem>>, vector<1x8x256xbf16>
    %53 = vector.shape_cast %52 : vector<1x8x256xbf16> to vector<8x256xbf16>
    %54 = vector.shape_cast %51 : vector<8x256xbf16> to vector<1x8x256xbf16>
    tpu.vector_store %arg9[%c0_28, %c0_29, %c0_30], %54 {strides = array<i32>} : memref<2x8x512xbf16, #tpu.memory_space<vmem>>, vector<1x8x256xbf16>,
    %c0_31 = arith.constant 0 : index
    %c0_32 = arith.constant 0 : index
    %c0_33 = arith.constant 0 : index
    %55 = vector.load %arg9[%c0_31, %c0_32, %c0_33] : memref<2x8x512xbf16, #tpu.memory_space<vmem>>, vector<1x8x256xbf16>
    %56 = vector.shape_cast %55 : vector<1x8x256xbf16> to vector<8x256xbf16>
    %c0_i32_34 = arith.constant 0 : i32
    %c0_i32_35 = arith.constant 0 : i32
    %c0_i32_36 = arith.constant 0 : i32
    %c0_i32_37 = arith.constant 0 : i32
    %57 = tpu.memref_slice %arg4[%c0_i32_36, %c0_i32_37] : memref<128x128xbf16, #tpu.memory_space<any>> -> memref<128x128xbf16, #tpu.memory_space<any>>
    %c0_i32_38 = arith.constant 0 : i32
    %c0_i32_39 = arith.constant 0 : i32
    %58 = tpu.memref_slice %arg10[%c0_i32_34, %c0_i32_38, %c0_i32_39] : memref<2x512x512xbf16, #tpu.memory_space<vmem>> -> memref<1x128x128xbf16, #tpu.memory_space<vmem>>
    %59 = tpu.memref_squeeze %58 : memref<1x128x128xbf16, #tpu.memory_space<vmem>> -> memref<128x128xbf16, #tpu.memory_space<vmem>>
    %60 = tpu.memref_slice %arg11[%c0_i32_35] : memref<2x!tpu.dma_semaphore, #tpu.memory_space<semaphore_mem>> -> memref<1x!tpu.dma_semaphore, #tpu.memory_space<semaphore_mem>>
    %61 = tpu.memref_squeeze %60 : memref<1x!tpu.dma_semaphore, #tpu.memory_space<semaphore_mem>> -> memref<!tpu.dma_semaphore, #tpu.memory_space<semaphore_mem>>
    tpu.enqueue_dma source(%57 : memref<128x128xbf16, #tpu.memory_space<any>>) target(%59 : memref<128x128xbf16, #tpu.memory_space<vmem>>) target_semaphore(%61 : memref<!tpu.dma_semaphore, #tpu.memory_space<semaphore_mem>>)
    %c1_i32_40 = arith.constant 1 : i32
    %c1_i32_41 = arith.constant 1 : i32
    %c0_i32_42 = arith.constant 0 : i32
    %c0_i32_43 = arith.constant 0 : i32
    %62 = tpu.memref_slice %arg3[%c0_i32_42, %c0_i32_43] : memref<256x128xbf16, #tpu.memory_space<any>> -> memref<256x128xbf16, #tpu.memory_space<any>>
    %c0_i32_44 = arith.constant 0 : i32
    %c0_i32_45 = arith.constant 0 : i32
    %63 = tpu.memref_slice %arg10[%c1_i32_40, %c0_i32_44, %c0_i32_45] : memref<2x512x512xbf16, #tpu.memory_space<vmem>> -> memref<1x256x128xbf16, #tpu.memory_space<vmem>>
    %64 = tpu.memref_squeeze %63 : memref<1x256x128xbf16, #tpu.memory_space<vmem>> -> memref<256x128xbf16, #tpu.memory_space<vmem>>
    %65 = tpu.memref_slice %arg11[%c1_i32_41] : memref<2x!tpu.dma_semaphore, #tpu.memory_space<semaphore_mem>> -> memref<1x!tpu.dma_semaphore, #tpu.memory_space<semaphore_mem>>
    %66 = tpu.memref_squeeze %65 : memref<1x!tpu.dma_semaphore, #tpu.memory_space<semaphore_mem>> -> memref<!tpu.dma_semaphore, #tpu.memory_space<semaphore_mem>>
    tpu.wait_dma2 semaphore(%66 : memref<!tpu.dma_semaphore, #tpu.memory_space<semaphore_mem>>) src(%62 : memref<256x128xbf16, #tpu.memory_space<any>>) dst(%64 : memref<256x128xbf16, #tpu.memory_space<vmem>>)
    %c1 = arith.constant 1 : index
    %c0_46 = arith.constant 0 : index
    %c0_47 = arith.constant 0 : index
    %67 = vector.load %arg10[%c1, %c0_46, %c0_47] : memref<2x512x512xbf16, #tpu.memory_space<vmem>>, vector<1x256x128xbf16>
    %68 = vector.shape_cast %67 : vector<1x256x128xbf16> to vector<256x128xbf16>
    %cst_48 = arith.constant dense<0.000000e+00> : vector<8x128xf32>
    %69 = tpu.matmul %56, %68, %cst_48 {dimension_numbers = #tpu.dot_dimension_numbers<[1], [0], [0], [1], [0, 0, 1, 1], [], []>} : vector<8x256xbf16>, vector<256x128xbf16>, vector<8x128xf32> -> vector<8x128xf32>
    %c8 = arith.constant 8 : index
    %c0_49 = arith.constant 0 : index
    %70 = vector.load %arg1[%c8, %c0_49] : memref<48x512xf32, #tpu.memory_space<vmem>>, vector<8x128xf32>
    %71 = vector.extract_strided_slice %70 {offsets = [0, 0], sizes = [1, 128], strides = [1, 1]} : vector<8x128xf32> to vector<1x128xf32>
    %72 = vector.broadcast %71 : vector<1x128xf32> to vector<8x128xf32>
    %73 = arith.addf %69, %72 : vector<8x128xf32>
    %cst_50 = arith.constant 0.000000e+00 : f32
    %74 = vector.broadcast %cst_50 : f32 to vector<8x128xf32>
    %75 = arith.maximumf %73, %74 : vector<8x128xf32>
    %cst_51 = arith.constant dense<0.000000e+00> : vector<128xf32>
    %76 = vector.multi_reduction <add>, %75, %cst_51 [0] : vector<8x128xf32> to vector<128xf32>
    %77 = vector.shape_cast %76 : vector<128xf32> to vector<1x128xf32>
    %cst_52 = arith.constant 8.000000e+00 : f32
    %78 = vector.broadcast %cst_52 : f32 to vector<1x128xf32>
    %79 = arith.divf %77, %78 : vector<1x128xf32>
    %80 = vector.broadcast %79 : vector<1x128xf32> to vector<8x128xf32>
    %81 = arith.subf %75, %80 : vector<8x128xf32>
    %82 = vector.broadcast %79 : vector<1x128xf32> to vector<8x128xf32>
    %83 = arith.subf %75, %82 : vector<8x128xf32>
    %84 = arith.mulf %81, %83 : vector<8x128xf32>
    %cst_53 = arith.constant dense<0.000000e+00> : vector<128xf32>
    %85 = vector.multi_reduction <add>, %84, %cst_53 [0] : vector<8x128xf32> to vector<128xf32>
    %86 = vector.shape_cast %85 : vector<128xf32> to vector<1x128xf32>
    %cst_54 = arith.constant 8.000000e+00 : f32
    %87 = vector.broadcast %cst_54 : f32 to vector<1x128xf32>
    %88 = arith.divf %86, %87 : vector<1x128xf32>
    %89 = vector.broadcast %79 : vector<1x128xf32> to vector<8x128xf32>
    %90 = arith.subf %75, %89 : vector<8x128xf32>
    %cst_55 = arith.constant 9.99999974E-6 : f32
    %91 = vector.broadcast %cst_55 : f32 to vector<1x128xf32>
    %92 = arith.addf %88, %91 : vector<1x128xf32>
    %93 = math.rsqrt %92 : vector<1x128xf32>
    %94 = vector.broadcast %93 : vector<1x128xf32> to vector<8x128xf32>
    %95 = arith.mulf %90, %94 : vector<8x128xf32>
    %96 = vector.extract_strided_slice %70 {offsets = [1, 0], sizes = [1, 128], strides = [1, 1]} : vector<8x128xf32> to vector<1x128xf32>
    %97 = vector.broadcast %96 : vector<1x128xf32> to vector<8x128xf32>
    %98 = arith.mulf %95, %97 : vector<8x128xf32>
    %99 = vector.extract_strided_slice %70 {offsets = [2, 0], sizes = [1, 128], strides = [1, 1]} : vector<8x128xf32> to vector<1x128xf32>
    %100 = vector.broadcast %99 : vector<1x128xf32> to vector<8x128xf32>
    %101 = arith.addf %98, %100 : vector<8x128xf32>
    %102 = arith.truncf %101 : vector<8x128xf32> to vector<8x128xbf16>
    %c1_56 = arith.constant 1 : index
    %c0_57 = arith.constant 0 : index
    %c0_58 = arith.constant 0 : index
    %103 = vector.load %arg9[%c1_56, %c0_57, %c0_58] : memref<2x8x512xbf16, #tpu.memory_space<vmem>>, vector<1x8x128xbf16>
    %104 = vector.shape_cast %103 : vector<1x8x128xbf16> to vector<8x128xbf16>
    %105 = vector.shape_cast %102 : vector<8x128xbf16> to vector<1x8x128xbf16>
    tpu.vector_store %arg9[%c1_56, %c0_57, %c0_58], %105 {strides = array<i32>} : memref<2x8x512xbf16, #tpu.memory_space<vmem>>, vector<1x8x128xbf16>,
    %c1_59 = arith.constant 1 : index
    %c0_60 = arith.constant 0 : index
    %c0_61 = arith.constant 0 : index
    %106 = vector.load %arg9[%c1_59, %c0_60, %c0_61] : memref<2x8x512xbf16, #tpu.memory_space<vmem>>, vector<1x8x128xbf16>
    %107 = vector.shape_cast %106 : vector<1x8x128xbf16> to vector<8x128xbf16>
    %c1_i32_62 = arith.constant 1 : i32
    %c1_i32_63 = arith.constant 1 : i32
    %c0_i32_64 = arith.constant 0 : i32
    %c0_i32_65 = arith.constant 0 : i32
    %108 = tpu.memref_slice %arg5[%c0_i32_64, %c0_i32_65] : memref<128x128xbf16, #tpu.memory_space<any>> -> memref<128x128xbf16, #tpu.memory_space<any>>
    %c0_i32_66 = arith.constant 0 : i32
    %c0_i32_67 = arith.constant 0 : i32
    %109 = tpu.memref_slice %arg10[%c1_i32_62, %c0_i32_66, %c0_i32_67] : memref<2x512x512xbf16, #tpu.memory_space<vmem>> -> memref<1x128x128xbf16, #tpu.memory_space<vmem>>
    %110 = tpu.memref_squeeze %109 : memref<1x128x128xbf16, #tpu.memory_space<vmem>> -> memref<128x128xbf16, #tpu.memory_space<vmem>>
    %111 = tpu.memref_slice %arg11[%c1_i32_63] : memref<2x!tpu.dma_semaphore, #tpu.memory_space<semaphore_mem>> -> memref<1x!tpu.dma_semaphore, #tpu.memory_space<semaphore_mem>>
    %112 = tpu.memref_squeeze %111 : memref<1x!tpu.dma_semaphore, #tpu.memory_space<semaphore_mem>> -> memref<!tpu.dma_semaphore, #tpu.memory_space<semaphore_mem>>
    tpu.enqueue_dma source(%108 : memref<128x128xbf16, #tpu.memory_space<any>>) target(%110 : memref<128x128xbf16, #tpu.memory_space<vmem>>) target_semaphore(%112 : memref<!tpu.dma_semaphore, #tpu.memory_space<semaphore_mem>>)
    %c0_i32_68 = arith.constant 0 : i32
    %c0_i32_69 = arith.constant 0 : i32
    %c0_i32_70 = arith.constant 0 : i32
    %c0_i32_71 = arith.constant 0 : i32
    %113 = tpu.memref_slice %arg4[%c0_i32_70, %c0_i32_71] : memref<128x128xbf16, #tpu.memory_space<any>> -> memref<128x128xbf16, #tpu.memory_space<any>>
    %c0_i32_72 = arith.constant 0 : i32
    %c0_i32_73 = arith.constant 0 : i32
    %114 = tpu.memref_slice %arg10[%c0_i32_68, %c0_i32_72, %c0_i32_73] : memref<2x512x512xbf16, #tpu.memory_space<vmem>> -> memref<1x128x128xbf16, #tpu.memory_space<vmem>>
    %115 = tpu.memref_squeeze %114 : memref<1x128x128xbf16, #tpu.memory_space<vmem>> -> memref<128x128xbf16, #tpu.memory_space<vmem>>
    %116 = tpu.memref_slice %arg11[%c0_i32_69] : memref<2x!tpu.dma_semaphore, #tpu.memory_space<semaphore_mem>> -> memref<1x!tpu.dma_semaphore, #tpu.memory_space<semaphore_mem>>
    %117 = tpu.memref_squeeze %116 : memref<1x!tpu.dma_semaphore, #tpu.memory_space<semaphore_mem>> -> memref<!tpu.dma_semaphore, #tpu.memory_space<semaphore_mem>>
    tpu.wait_dma2 semaphore(%117 : memref<!tpu.dma_semaphore, #tpu.memory_space<semaphore_mem>>) src(%113 : memref<128x128xbf16, #tpu.memory_space<any>>) dst(%115 : memref<128x128xbf16, #tpu.memory_space<vmem>>)
    %c0_74 = arith.constant 0 : index
    %c0_75 = arith.constant 0 : index
    %c0_76 = arith.constant 0 : index
    %118 = vector.load %arg10[%c0_74, %c0_75, %c0_76] : memref<2x512x512xbf16, #tpu.memory_space<vmem>>, vector<1x128x128xbf16>
    %119 = vector.shape_cast %118 : vector<1x128x128xbf16> to vector<128x128xbf16>
    %cst_77 = arith.constant dense<0.000000e+00> : vector<8x128xf32>
    %120 = tpu.matmul %107, %119, %cst_77 {dimension_numbers = #tpu.dot_dimension_numbers<[1], [0], [0], [1], [0, 0, 1, 1], [], []>} : vector<8x128xbf16>, vector<128x128xbf16>, vector<8x128xf32> -> vector<8x128xf32>
    %c16 = arith.constant 16 : index
    %c0_78 = arith.constant 0 : index
    %121 = vector.load %arg1[%c16, %c0_78] : memref<48x512xf32, #tpu.memory_space<vmem>>, vector<8x128xf32>
    %122 = vector.extract_strided_slice %121 {offsets = [0, 0], sizes = [1, 128], strides = [1, 1]} : vector<8x128xf32> to vector<1x128xf32>
    %123 = vector.broadcast %122 : vector<1x128xf32> to vector<8x128xf32>
    %124 = arith.addf %120, %123 : vector<8x128xf32>
    %cst_79 = arith.constant 0.000000e+00 : f32
    %125 = vector.broadcast %cst_79 : f32 to vector<8x128xf32>
    %126 = arith.maximumf %124, %125 : vector<8x128xf32>
    %cst_80 = arith.constant dense<0.000000e+00> : vector<128xf32>
    %127 = vector.multi_reduction <add>, %126, %cst_80 [0] : vector<8x128xf32> to vector<128xf32>
    %128 = vector.shape_cast %127 : vector<128xf32> to vector<1x128xf32>
    %cst_81 = arith.constant 8.000000e+00 : f32
    %129 = vector.broadcast %cst_81 : f32 to vector<1x128xf32>
    %130 = arith.divf %128, %129 : vector<1x128xf32>
    %131 = vector.broadcast %130 : vector<1x128xf32> to vector<8x128xf32>
    %132 = arith.subf %126, %131 : vector<8x128xf32>
    %133 = vector.broadcast %130 : vector<1x128xf32> to vector<8x128xf32>
    %134 = arith.subf %126, %133 : vector<8x128xf32>
    %135 = arith.mulf %132, %134 : vector<8x128xf32>
    %cst_82 = arith.constant dense<0.000000e+00> : vector<128xf32>
    %136 = vector.multi_reduction <add>, %135, %cst_82 [0] : vector<8x128xf32> to vector<128xf32>
    %137 = vector.shape_cast %136 : vector<128xf32> to vector<1x128xf32>
    %cst_83 = arith.constant 8.000000e+00 : f32
    %138 = vector.broadcast %cst_83 : f32 to vector<1x128xf32>
    %139 = arith.divf %137, %138 : vector<1x128xf32>
    %140 = vector.broadcast %130 : vector<1x128xf32> to vector<8x128xf32>
    %141 = arith.subf %126, %140 : vector<8x128xf32>
    %cst_84 = arith.constant 9.99999974E-6 : f32
    %142 = vector.broadcast %cst_84 : f32 to vector<1x128xf32>
    %143 = arith.addf %139, %142 : vector<1x128xf32>
    %144 = math.rsqrt %143 : vector<1x128xf32>
    %145 = vector.broadcast %144 : vector<1x128xf32> to vector<8x128xf32>
    %146 = arith.mulf %141, %145 : vector<8x128xf32>
    %147 = vector.extract_strided_slice %121 {offsets = [1, 0], sizes = [1, 128], strides = [1, 1]} : vector<8x128xf32> to vector<1x128xf32>
    %148 = vector.broadcast %147 : vector<1x128xf32> to vector<8x128xf32>
    %149 = arith.mulf %146, %148 : vector<8x128xf32>
    %150 = vector.extract_strided_slice %121 {offsets = [2, 0], sizes = [1, 128], strides = [1, 1]} : vector<8x128xf32> to vector<1x128xf32>
    %151 = vector.broadcast %150 : vector<1x128xf32> to vector<8x128xf32>
    %152 = arith.addf %149, %151 : vector<8x128xf32>
    %153 = arith.truncf %152 : vector<8x128xf32> to vector<8x128xbf16>
    %c0_85 = arith.constant 0 : index
    %c0_86 = arith.constant 0 : index
    %c0_87 = arith.constant 0 : index
    %154 = vector.load %arg9[%c0_85, %c0_86, %c0_87] : memref<2x8x512xbf16, #tpu.memory_space<vmem>>, vector<1x8x128xbf16>
    %155 = vector.shape_cast %154 : vector<1x8x128xbf16> to vector<8x128xbf16>
    %156 = vector.shape_cast %153 : vector<8x128xbf16> to vector<1x8x128xbf16>
    tpu.vector_store %arg9[%c0_85, %c0_86, %c0_87], %156 {strides = array<i32>} : memref<2x8x512xbf16, #tpu.memory_space<vmem>>, vector<1x8x128xbf16>,
    %c0_88 = arith.constant 0 : index
    %c0_89 = arith.constant 0 : index
    %c0_90 = arith.constant 0 : index
    %157 = vector.load %arg9[%c0_88, %c0_89, %c0_90] : memref<2x8x512xbf16, #tpu.memory_space<vmem>>, vector<1x8x128xbf16>
    %158 = vector.shape_cast %157 : vector<1x8x128xbf16> to vector<8x128xbf16>
    %c0_i32_91 = arith.constant 0 : i32
    %c0_i32_92 = arith.constant 0 : i32
    %c0_i32_93 = arith.constant 0 : i32
    %c0_i32_94 = arith.constant 0 : i32
    %159 = tpu.memref_slice %arg6[%c0_i32_93, %c0_i32_94] : memref<128x256xbf16, #tpu.memory_space<any>> -> memref<128x256xbf16, #tpu.memory_space<any>>
    %c0_i32_95 = arith.constant 0 : i32
    %c0_i32_96 = arith.constant 0 : i32
    %160 = tpu.memref_slice %arg10[%c0_i32_91, %c0_i32_95, %c0_i32_96] : memref<2x512x512xbf16, #tpu.memory_space<vmem>> -> memref<1x128x256xbf16, #tpu.memory_space<vmem>>
    %161 = tpu.memref_squeeze %160 : memref<1x128x256xbf16, #tpu.memory_space<vmem>> -> memref<128x256xbf16, #tpu.memory_space<vmem>>
    %162 = tpu.memref_slice %arg11[%c0_i32_92] : memref<2x!tpu.dma_semaphore, #tpu.memory_space<semaphore_mem>> -> memref<1x!tpu.dma_semaphore, #tpu.memory_space<semaphore_mem>>
    %163 = tpu.memref_squeeze %162 : memref<1x!tpu.dma_semaphore, #tpu.memory_space<semaphore_mem>> -> memref<!tpu.dma_semaphore, #tpu.memory_space<semaphore_mem>>
    tpu.enqueue_dma source(%159 : memref<128x256xbf16, #tpu.memory_space<any>>) target(%161 : memref<128x256xbf16, #tpu.memory_space<vmem>>) target_semaphore(%163 : memref<!tpu.dma_semaphore, #tpu.memory_space<semaphore_mem>>)
    %c1_i32_97 = arith.constant 1 : i32
    %c1_i32_98 = arith.constant 1 : i32
    %c0_i32_99 = arith.constant 0 : i32
    %c0_i32_100 = arith.constant 0 : i32
    %164 = tpu.memref_slice %arg5[%c0_i32_99, %c0_i32_100] : memref<128x128xbf16, #tpu.memory_space<any>> -> memref<128x128xbf16, #tpu.memory_space<any>>
    %c0_i32_101 = arith.constant 0 : i32
    %c0_i32_102 = arith.constant 0 : i32
    %165 = tpu.memref_slice %arg10[%c1_i32_97, %c0_i32_101, %c0_i32_102] : memref<2x512x512xbf16, #tpu.memory_space<vmem>> -> memref<1x128x128xbf16, #tpu.memory_space<vmem>>
    %166 = tpu.memref_squeeze %165 : memref<1x128x128xbf16, #tpu.memory_space<vmem>> -> memref<128x128xbf16, #tpu.memory_space<vmem>>
    %167 = tpu.memref_slice %arg11[%c1_i32_98] : memref<2x!tpu.dma_semaphore, #tpu.memory_space<semaphore_mem>> -> memref<1x!tpu.dma_semaphore, #tpu.memory_space<semaphore_mem>>
    %168 = tpu.memref_squeeze %167 : memref<1x!tpu.dma_semaphore, #tpu.memory_space<semaphore_mem>> -> memref<!tpu.dma_semaphore, #tpu.memory_space<semaphore_mem>>
    tpu.wait_dma2 semaphore(%168 : memref<!tpu.dma_semaphore, #tpu.memory_space<semaphore_mem>>) src(%164 : memref<128x128xbf16, #tpu.memory_space<any>>) dst(%166 : memref<128x128xbf16, #tpu.memory_space<vmem>>)
    %c1_103 = arith.constant 1 : index
    %c0_104 = arith.constant 0 : index
    %c0_105 = arith.constant 0 : index
    %169 = vector.load %arg10[%c1_103, %c0_104, %c0_105] : memref<2x512x512xbf16, #tpu.memory_space<vmem>>, vector<1x128x128xbf16>
    %170 = vector.shape_cast %169 : vector<1x128x128xbf16> to vector<128x128xbf16>
    %cst_106 = arith.constant dense<0.000000e+00> : vector<8x128xf32>
    %171 = tpu.matmul %158, %170, %cst_106 {dimension_numbers = #tpu.dot_dimension_numbers<[1], [0], [0], [1], [0, 0, 1, 1], [], []>} : vector<8x128xbf16>, vector<128x128xbf16>, vector<8x128xf32> -> vector<8x128xf32>
    %c24 = arith.constant 24 : index
    %c0_107 = arith.constant 0 : index
    %172 = vector.load %arg1[%c24, %c0_107] : memref<48x512xf32, #tpu.memory_space<vmem>>, vector<8x128xf32>
    %173 = vector.extract_strided_slice %172 {offsets = [0, 0], sizes = [1, 128], strides = [1, 1]} : vector<8x128xf32> to vector<1x128xf32>
    %174 = vector.broadcast %173 : vector<1x128xf32> to vector<8x128xf32>
    %175 = arith.addf %171, %174 : vector<8x128xf32>
    %cst_108 = arith.constant 0.000000e+00 : f32
    %176 = vector.broadcast %cst_108 : f32 to vector<8x128xf32>
    %177 = arith.maximumf %175, %176 : vector<8x128xf32>
    %cst_109 = arith.constant dense<0.000000e+00> : vector<128xf32>
    %178 = vector.multi_reduction <add>, %177, %cst_109 [0] : vector<8x128xf32> to vector<128xf32>
    %179 = vector.shape_cast %178 : vector<128xf32> to vector<1x128xf32>
    %cst_110 = arith.constant 8.000000e+00 : f32
    %180 = vector.broadcast %cst_110 : f32 to vector<1x128xf32>
    %181 = arith.divf %179, %180 : vector<1x128xf32>
    %182 = vector.broadcast %181 : vector<1x128xf32> to vector<8x128xf32>
    %183 = arith.subf %177, %182 : vector<8x128xf32>
    %184 = vector.broadcast %181 : vector<1x128xf32> to vector<8x128xf32>
    %185 = arith.subf %177, %184 : vector<8x128xf32>
    %186 = arith.mulf %183, %185 : vector<8x128xf32>
    %cst_111 = arith.constant dense<0.000000e+00> : vector<128xf32>
    %187 = vector.multi_reduction <add>, %186, %cst_111 [0] : vector<8x128xf32> to vector<128xf32>
    %188 = vector.shape_cast %187 : vector<128xf32> to vector<1x128xf32>
    %cst_112 = arith.constant 8.000000e+00 : f32
    %189 = vector.broadcast %cst_112 : f32 to vector<1x128xf32>
    %190 = arith.divf %188, %189 : vector<1x128xf32>
    %191 = vector.broadcast %181 : vector<1x128xf32> to vector<8x128xf32>
    %192 = arith.subf %177, %191 : vector<8x128xf32>
    %cst_113 = arith.constant 9.99999974E-6 : f32
    %193 = vector.broadcast %cst_113 : f32 to vector<1x128xf32>
    %194 = arith.addf %190, %193 : vector<1x128xf32>
    %195 = math.rsqrt %194 : vector<1x128xf32>
    %196 = vector.broadcast %195 : vector<1x128xf32> to vector<8x128xf32>
    %197 = arith.mulf %192, %196 : vector<8x128xf32>
    %198 = vector.extract_strided_slice %172 {offsets = [1, 0], sizes = [1, 128], strides = [1, 1]} : vector<8x128xf32> to vector<1x128xf32>
    %199 = vector.broadcast %198 : vector<1x128xf32> to vector<8x128xf32>
    %200 = arith.mulf %197, %199 : vector<8x128xf32>
    %201 = vector.extract_strided_slice %172 {offsets = [2, 0], sizes = [1, 128], strides = [1, 1]} : vector<8x128xf32> to vector<1x128xf32>
    %202 = vector.broadcast %201 : vector<1x128xf32> to vector<8x128xf32>
    %203 = arith.addf %200, %202 : vector<8x128xf32>
    %204 = arith.truncf %203 : vector<8x128xf32> to vector<8x128xbf16>
    %c1_114 = arith.constant 1 : index
    %c0_115 = arith.constant 0 : index
    %c0_116 = arith.constant 0 : index
    %205 = vector.load %arg9[%c1_114, %c0_115, %c0_116] : memref<2x8x512xbf16, #tpu.memory_space<vmem>>, vector<1x8x128xbf16>
    %206 = vector.shape_cast %205 : vector<1x8x128xbf16> to vector<8x128xbf16>
    %207 = vector.shape_cast %204 : vector<8x128xbf16> to vector<1x8x128xbf16>
    tpu.vector_store %arg9[%c1_114, %c0_115, %c0_116], %207 {strides = array<i32>} : memref<2x8x512xbf16, #tpu.memory_space<vmem>>, vector<1x8x128xbf16>,
    %c1_117 = arith.constant 1 : index
    %c0_118 = arith.constant 0 : index
    %c0_119 = arith.constant 0 : index
    %208 = vector.load %arg9[%c1_117, %c0_118, %c0_119] : memref<2x8x512xbf16, #tpu.memory_space<vmem>>, vector<1x8x128xbf16>
    %209 = vector.shape_cast %208 : vector<1x8x128xbf16> to vector<8x128xbf16>
    %c1_i32_120 = arith.constant 1 : i32
    %c1_i32_121 = arith.constant 1 : i32
    %c0_i32_122 = arith.constant 0 : i32
    %c0_i32_123 = arith.constant 0 : i32
    %210 = tpu.memref_slice %arg7[%c0_i32_122, %c0_i32_123] : memref<256x512xbf16, #tpu.memory_space<any>> -> memref<256x512xbf16, #tpu.memory_space<any>>
    %c0_i32_124 = arith.constant 0 : i32
    %c0_i32_125 = arith.constant 0 : i32
    %211 = tpu.memref_slice %arg10[%c1_i32_120, %c0_i32_124, %c0_i32_125] : memref<2x512x512xbf16, #tpu.memory_space<vmem>> -> memref<1x256x512xbf16, #tpu.memory_space<vmem>>
    %212 = tpu.memref_squeeze %211 : memref<1x256x512xbf16, #tpu.memory_space<vmem>> -> memref<256x512xbf16, #tpu.memory_space<vmem>>
    %213 = tpu.memref_slice %arg11[%c1_i32_121] : memref<2x!tpu.dma_semaphore, #tpu.memory_space<semaphore_mem>> -> memref<1x!tpu.dma_semaphore, #tpu.memory_space<semaphore_mem>>
    %214 = tpu.memref_squeeze %213 : memref<1x!tpu.dma_semaphore, #tpu.memory_space<semaphore_mem>> -> memref<!tpu.dma_semaphore, #tpu.memory_space<semaphore_mem>>
    tpu.enqueue_dma source(%210 : memref<256x512xbf16, #tpu.memory_space<any>>) target(%212 : memref<256x512xbf16, #tpu.memory_space<vmem>>) target_semaphore(%214 : memref<!tpu.dma_semaphore, #tpu.memory_space<semaphore_mem>>)
    %c0_i32_126 = arith.constant 0 : i32
    %c0_i32_127 = arith.constant 0 : i32
    %c0_i32_128 = arith.constant 0 : i32
    %c0_i32_129 = arith.constant 0 : i32
    %215 = tpu.memref_slice %arg6[%c0_i32_128, %c0_i32_129] : memref<128x256xbf16, #tpu.memory_space<any>> -> memref<128x256xbf16, #tpu.memory_space<any>>
    %c0_i32_130 = arith.constant 0 : i32
    %c0_i32_131 = arith.constant 0 : i32
    %216 = tpu.memref_slice %arg10[%c0_i32_126, %c0_i32_130, %c0_i32_131] : memref<2x512x512xbf16, #tpu.memory_space<vmem>> -> memref<1x128x256xbf16, #tpu.memory_space<vmem>>
    %217 = tpu.memref_squeeze %216 : memref<1x128x256xbf16, #tpu.memory_space<vmem>> -> memref<128x256xbf16, #tpu.memory_space<vmem>>
    %218 = tpu.memref_slice %arg11[%c0_i32_127] : memref<2x!tpu.dma_semaphore, #tpu.memory_space<semaphore_mem>> -> memref<1x!tpu.dma_semaphore, #tpu.memory_space<semaphore_mem>>
    %219 = tpu.memref_squeeze %218 : memref<1x!tpu.dma_semaphore, #tpu.memory_space<semaphore_mem>> -> memref<!tpu.dma_semaphore, #tpu.memory_space<semaphore_mem>>
    tpu.wait_dma2 semaphore(%219 : memref<!tpu.dma_semaphore, #tpu.memory_space<semaphore_mem>>) src(%215 : memref<128x256xbf16, #tpu.memory_space<any>>) dst(%217 : memref<128x256xbf16, #tpu.memory_space<vmem>>)
    %c0_132 = arith.constant 0 : index
    %c0_133 = arith.constant 0 : index
    %c0_134 = arith.constant 0 : index
    %220 = vector.load %arg10[%c0_132, %c0_133, %c0_134] : memref<2x512x512xbf16, #tpu.memory_space<vmem>>, vector<1x128x256xbf16>
    %221 = vector.shape_cast %220 : vector<1x128x256xbf16> to vector<128x256xbf16>
    %cst_135 = arith.constant dense<0.000000e+00> : vector<8x256xf32>
    %222 = tpu.matmul %209, %221, %cst_135 {dimension_numbers = #tpu.dot_dimension_numbers<[1], [0], [0], [1], [0, 0, 1, 1], [], []>} : vector<8x128xbf16>, vector<128x256xbf16>, vector<8x256xf32> -> vector<8x256xf32>
    %c32 = arith.constant 32 : index
    %c0_136 = arith.constant 0 : index
    %223 = vector.load %arg1[%c32, %c0_136] : memref<48x512xf32, #tpu.memory_space<vmem>>, vector<8x256xf32>
    %224 = vector.extract_strided_slice %223 {offsets = [0, 0], sizes = [1, 256], strides = [1, 1]} : vector<8x256xf32> to vector<1x256xf32>
    %225 = vector.broadcast %224 : vector<1x256xf32> to vector<8x256xf32>
    %226 = arith.addf %222, %225 : vector<8x256xf32>
    %cst_137 = arith.constant 0.000000e+00 : f32
    %227 = vector.broadcast %cst_137 : f32 to vector<8x256xf32>
    %228 = arith.maximumf %226, %227 : vector<8x256xf32>
    %cst_138 = arith.constant dense<0.000000e+00> : vector<256xf32>
    %229 = vector.multi_reduction <add>, %228, %cst_138 [0] : vector<8x256xf32> to vector<256xf32>
    %230 = vector.shape_cast %229 : vector<256xf32> to vector<1x256xf32>
    %cst_139 = arith.constant 8.000000e+00 : f32
    %231 = vector.broadcast %cst_139 : f32 to vector<1x256xf32>
    %232 = arith.divf %230, %231 : vector<1x256xf32>
    %233 = vector.broadcast %232 : vector<1x256xf32> to vector<8x256xf32>
    %234 = arith.subf %228, %233 : vector<8x256xf32>
    %235 = vector.broadcast %232 : vector<1x256xf32> to vector<8x256xf32>
    %236 = arith.subf %228, %235 : vector<8x256xf32>
    %237 = arith.mulf %234, %236 : vector<8x256xf32>
    %cst_140 = arith.constant dense<0.000000e+00> : vector<256xf32>
    %238 = vector.multi_reduction <add>, %237, %cst_140 [0] : vector<8x256xf32> to vector<256xf32>
    %239 = vector.shape_cast %238 : vector<256xf32> to vector<1x256xf32>
    %cst_141 = arith.constant 8.000000e+00 : f32
    %240 = vector.broadcast %cst_141 : f32 to vector<1x256xf32>
    %241 = arith.divf %239, %240 : vector<1x256xf32>
    %242 = vector.broadcast %232 : vector<1x256xf32> to vector<8x256xf32>
    %243 = arith.subf %228, %242 : vector<8x256xf32>
    %cst_142 = arith.constant 9.99999974E-6 : f32
    %244 = vector.broadcast %cst_142 : f32 to vector<1x256xf32>
    %245 = arith.addf %241, %244 : vector<1x256xf32>
    %246 = math.rsqrt %245 : vector<1x256xf32>
    %247 = vector.broadcast %246 : vector<1x256xf32> to vector<8x256xf32>
    %248 = arith.mulf %243, %247 : vector<8x256xf32>
    %249 = vector.extract_strided_slice %223 {offsets = [1, 0], sizes = [1, 256], strides = [1, 1]} : vector<8x256xf32> to vector<1x256xf32>
    %250 = vector.broadcast %249 : vector<1x256xf32> to vector<8x256xf32>
    %251 = arith.mulf %248, %250 : vector<8x256xf32>
    %252 = vector.extract_strided_slice %223 {offsets = [2, 0], sizes = [1, 256], strides = [1, 1]} : vector<8x256xf32> to vector<1x256xf32>
    %253 = vector.broadcast %252 : vector<1x256xf32> to vector<8x256xf32>
    %254 = arith.addf %251, %253 : vector<8x256xf32>
    %255 = arith.truncf %254 : vector<8x256xf32> to vector<8x256xbf16>
    %c0_143 = arith.constant 0 : index
    %c0_144 = arith.constant 0 : index
    %c0_145 = arith.constant 0 : index
    %256 = vector.load %arg9[%c0_143, %c0_144, %c0_145] : memref<2x8x512xbf16, #tpu.memory_space<vmem>>, vector<1x8x256xbf16>
    %257 = vector.shape_cast %256 : vector<1x8x256xbf16> to vector<8x256xbf16>
    %258 = vector.shape_cast %255 : vector<8x256xbf16> to vector<1x8x256xbf16>
    tpu.vector_store %arg9[%c0_143, %c0_144, %c0_145], %258 {strides = array<i32>} : memref<2x8x512xbf16, #tpu.memory_space<vmem>>, vector<1x8x256xbf16>,
    %c0_146 = arith.constant 0 : index
    %c0_147 = arith.constant 0 : index
    %c0_148 = arith.constant 0 : index
    %259 = vector.load %arg9[%c0_146, %c0_147, %c0_148] : memref<2x8x512xbf16, #tpu.memory_space<vmem>>, vector<1x8x256xbf16>
    %260 = vector.shape_cast %259 : vector<1x8x256xbf16> to vector<8x256xbf16>
    %c1_i32_149 = arith.constant 1 : i32
    %c1_i32_150 = arith.constant 1 : i32
    %c0_i32_151 = arith.constant 0 : i32
    %c0_i32_152 = arith.constant 0 : i32
    %261 = tpu.memref_slice %arg7[%c0_i32_151, %c0_i32_152] : memref<256x512xbf16, #tpu.memory_space<any>> -> memref<256x512xbf16, #tpu.memory_space<any>>
    %c0_i32_153 = arith.constant 0 : i32
    %c0_i32_154 = arith.constant 0 : i32
    %262 = tpu.memref_slice %arg10[%c1_i32_149, %c0_i32_153, %c0_i32_154] : memref<2x512x512xbf16, #tpu.memory_space<vmem>> -> memref<1x256x512xbf16, #tpu.memory_space<vmem>>
    %263 = tpu.memref_squeeze %262 : memref<1x256x512xbf16, #tpu.memory_space<vmem>> -> memref<256x512xbf16, #tpu.memory_space<vmem>>
    %264 = tpu.memref_slice %arg11[%c1_i32_150] : memref<2x!tpu.dma_semaphore, #tpu.memory_space<semaphore_mem>> -> memref<1x!tpu.dma_semaphore, #tpu.memory_space<semaphore_mem>>
    %265 = tpu.memref_squeeze %264 : memref<1x!tpu.dma_semaphore, #tpu.memory_space<semaphore_mem>> -> memref<!tpu.dma_semaphore, #tpu.memory_space<semaphore_mem>>
    tpu.wait_dma2 semaphore(%265 : memref<!tpu.dma_semaphore, #tpu.memory_space<semaphore_mem>>) src(%261 : memref<256x512xbf16, #tpu.memory_space<any>>) dst(%263 : memref<256x512xbf16, #tpu.memory_space<vmem>>)
    %c1_155 = arith.constant 1 : index
    %c0_156 = arith.constant 0 : index
    %c0_157 = arith.constant 0 : index
    %266 = vector.load %arg10[%c1_155, %c0_156, %c0_157] : memref<2x512x512xbf16, #tpu.memory_space<vmem>>, vector<1x256x512xbf16>
    %267 = vector.shape_cast %266 : vector<1x256x512xbf16> to vector<256x512xbf16>
    %cst_158 = arith.constant dense<0.000000e+00> : vector<8x512xf32>
    %268 = tpu.matmul %260, %267, %cst_158 {dimension_numbers = #tpu.dot_dimension_numbers<[1], [0], [0], [1], [0, 0, 1, 1], [], []>} : vector<8x256xbf16>, vector<256x512xbf16>, vector<8x512xf32> -> vector<8x512xf32>
    %c40 = arith.constant 40 : index
    %c0_159 = arith.constant 0 : index
    %269 = vector.load %arg1[%c40, %c0_159] : memref<48x512xf32, #tpu.memory_space<vmem>>, vector<8x512xf32>
    %270 = vector.extract_strided_slice %269 {offsets = [0, 0], sizes = [1, 512], strides = [1, 1]} : vector<8x512xf32> to vector<1x512xf32>
    %271 = vector.broadcast %270 : vector<1x512xf32> to vector<8x512xf32>
    %272 = arith.addf %268, %271 : vector<8x512xf32>
    %c0_160 = arith.constant 0 : index
    %c0_161 = arith.constant 0 : index
    %273 = vector.load %arg8[%c0_160, %c0_161] : memref<8x512xf32, #tpu.memory_space<vmem>>, vector<8x512xf32>
    tpu.vector_store %arg8[%c0_160, %c0_161], %272 {strides = array<i32>} : memref<8x512xf32, #tpu.memory_space<vmem>>, vector<8x512xf32>,
    return
  }
}

</mosaic_0001>

<llo_original>
// kernel: tpu_custom_call.1
$region0: #{tpu_custom_call.1}
  #allocation0 [shape = 'u32[]', space=smem, size = 0x4, offset = 0x4, fixed_abs, tag = 'smem constant byte address 0x4 - core index']
  #allocation1 [shape = 'u32[72,128]{1,0:T(1,128)}', space=vmem, size = 0x9000, scoped, tag = 'internal scratch']
  #allocation2 [shape = 'bf16[2,8,512]{2,1,0:T(8,128)(2,1)}', space=vmem, size = 0x4000, scoped, tag = 'scratch operand']
  #allocation3 [shape = 'bf16[2,512,512]{2,1,0:T(8,128)(2,1)}', space=vmem, size = 0x100000, scoped, tag = 'scratch operand']
  #allocation4 [shape = 's32[2]{0}', space=sflag, size = 0x8, scoped, tag = 'scratch operand']
  #allocation11 [shape = 's32[]', space=sflag, size = 0x4, offset = 0, fixed_abs, tag = 'sflag constant byte address 0x0 - dummy sync flag']
  #allocation12 [shape = 's32[]', space=sflag, size = 0x4, offset = 0, fixed_abs, tag = 'sflag constant byte address 0x0 - dummy sync flag']
  #allocation13 [shape = 's32[]', space=sflag, size = 0x4, offset = 0, fixed_abs, tag = 'sflag constant byte address 0x0 - dummy sync flag']
  #allocation14 [shape = 's32[]', space=sflag, size = 0x4, offset = 0, fixed_abs, tag = 'sflag constant byte address 0x0 - dummy sync flag']
  #allocation15 [shape = 's32[]', space=sflag, size = 0x4, offset = 0, fixed_abs, tag = 'sflag constant byte address 0x0 - dummy sync flag']
  #allocation16 [shape = 's32[]', space=sflag, size = 0x4, offset = 0, fixed_abs, tag = 'sflag constant byte address 0x0 - dummy sync flag']
  #allocation17 [shape = 's32[]', space=sflag, size = 0x4, offset = 0, fixed_abs, tag = 'sflag constant byte address 0x0 - dummy sync flag']
  #allocation18 [shape = 'u32[]', space=smem, size = 0x4, offset = 0x44, fixed_abs, tag = 'smem constant byte address 0x44 - assertion arg 0']
  #allocation19 [shape = 'u32[]', space=smem, size = 0x4, offset = 0x48, fixed_abs, tag = 'smem constant byte address 0x48 - assertion arg 1']
  %s0 = inlined_call_operand.hbm [shape: bf16[8,512], index: 0, kind: input, shape index: {}]
  %s1 = inlined_call_operand.hbm [shape: f32[48,512], index: 1, kind: input, shape index: {}]
  %s2 = inlined_call_operand.hbm [shape: bf16[512,256], index: 2, kind: input, shape index: {}]
  %s3 = inlined_call_operand.hbm [shape: bf16[256,128], index: 3, kind: input, shape index: {}]
  %s4 = inlined_call_operand.hbm [shape: bf16[128,128], index: 4, kind: input, shape index: {}]
  %s5 = inlined_call_operand.hbm [shape: bf16[128,128], index: 5, kind: input, shape index: {}]
  %s6 = inlined_call_operand.hbm [shape: bf16[128,256], index: 6, kind: input, shape index: {}]
  %s7 = inlined_call_operand.hbm [shape: bf16[256,512], index: 7, kind: input, shape index: {}]
  %s8 = inlined_call_operand.hbm [shape: f32[8,512], index: 8, kind: output, shape index: {}]
  %s9 = sld [smem:[#allocation0]]
  $region30: #{tpu_custom_call.1} parent=0
    _
  %s11 = ssub.s32 1, %s9
  %s12 = scalar_select 0, %s11, %s9
  $region1: #{tpu_custom_call.1} parent=0
    #allocation5 [shape = 'u8[8192]{0}', space=vmem, size = 0x2000, scoped, tag = 'input window, operand 0, single buffered']
    #allocation6 [shape = 's32[1]{0}', space=sflag, size = 0x4, scoped, tag = 'scoped memory for tpu_custom_call.1']
    #allocation7 [shape = 's32[1]{0}', space=sflag, size = 0x4, scoped, tag = 'scoped memory for tpu_custom_call.1']
    #allocation8 [shape = 'u8[98304]{0}', space=vmem, size = 0x18000, scoped, tag = 'input window, operand 1, single buffered']
    #allocation9 [shape = 's32[1]{0}', space=sflag, size = 0x4, scoped, tag = 'scoped memory for tpu_custom_call.1']
    #allocation10 [shape = 'u8[16384]{0}', space=vmem, size = 0x4000, scoped, tag = 'output window, operand 0, single buffered']
    %13 = vsyncpa [#allocation6], 0
    %14 = vsyncpa [#allocation9], 0
    %15 = vsyncpa [#allocation7], 0
    // Predicated region
    $region2: #{tpu_custom_call.1} parent=1 // pred_check
      _
    $region3: #{tpu_custom_call.1} parent=1 // pred_check_branch
      %17 = sbr.rel (0) target = $region5
    $region4: #{tpu_custom_call.1} parent=1 // pred_region
      %19 = vsyncadd [#allocation6], 0
      %s21 = sshll.u32 %s0, 4
      %s22 = int_to_ptr.hbm [resolvable:$true] %s21
      %s23 = sshll.u32 [#allocation5], 4
      %s24 = int_to_ptr.vmem [resolvable:$true] %s23
      %26 = dma.hbm_to_vmem [thread:$0]  %s22, 256, %s24, [#allocation6]
    $region5: #{tpu_custom_call.1} parent=1 // pred_fallthru
      _
    // Predicated region
    $region6: #{tpu_custom_call.1} parent=1 // pred_check
      _
    $region7: #{tpu_custom_call.1} parent=1 // pred_check_branch
      %28 = sbr.rel (0) target = $region9
    $region8: #{tpu_custom_call.1} parent=1 // pred_region
      %30 = vsyncadd [#allocation9], 0
      %s31 = sshll.u32 %s1, 4
      %s32 = int_to_ptr.hbm [resolvable:$true] %s31
      %s33 = sshll.u32 [#allocation8], 4
      %s34 = int_to_ptr.vmem [resolvable:$true] %s33
      %39 = dma.hbm_to_vmem [thread:$0]  %s32, 3072, %s34, [#allocation9], 512, 512, 32
    $region9: #{tpu_custom_call.1} parent=1 // pred_fallthru
      _
    // Predicated region
    $region10: #{tpu_custom_call.1} parent=1 // pred_check
      _
    $region11: #{tpu_custom_call.1} parent=1 // pred_check_branch
      %41 = sbr.rel (0) target = $region13
    $region12: #{tpu_custom_call.1} parent=1 // pred_region
      %43 = dma.done [#allocation6], 256
    $region13: #{tpu_custom_call.1} parent=1 // pred_fallthru
      _
    // Predicated region
    $region14: #{tpu_custom_call.1} parent=1 // pred_check
      _
    $region15: #{tpu_custom_call.1} parent=1 // pred_check_branch
      %45 = sbr.rel (0) target = $region17
    $region16: #{tpu_custom_call.1} parent=1 // pred_region
      %47 = dma.done [#allocation9], 3072
    $region17: #{tpu_custom_call.1} parent=1 // pred_fallthru
      _
    %s48 = sshll.u32 %s2, 4
    %s49 = int_to_ptr.hbm [resolvable:$true] %s48
    %s50 = sshll.u32 [#allocation3], 4
    %s51 = int_to_ptr.vmem [resolvable:$true] %s50
    %55 = dma.hbm_to_vmem [thread:$0]  %s49, 8192, %s51, [#allocation4], 128, 256, 8
    %v56 = vld [vmem:[#allocation5] sm:$0xff]
    %v57 = vld [vmem:[#allocation5 + $0x8] sm:$0xff]
    %s58 = scalar_lea.vmem [#allocation3], 1024
    %s59 = scalar_lea.sflag [#allocation4], 1
    %s60 = sshll.u32 %s3, 4
    %s61 = int_to_ptr.hbm [resolvable:$true] %s60
    %s62 = sshll.u32 %s58, 4
    %s63 = int_to_ptr.vmem [resolvable:$true] %s62
    %67 = dma.hbm_to_vmem [thread:$0]  %s61, 2048, %s63, %s59, 64, 256, 4
    %s68 = smul.u32 4, 64
    %s69 = smul.u32 %s68, 2
    %s70 = sshll.u32 %s69, 4
    %71 = dma.done [#allocation4], %s70
    %v72 = vld [vmem:[#allocation3] sm:$0xff]
    %v73 = vld [vmem:[#allocation3 + $0x10] sm:$0xff]
    %v74 = vld [vmem:[#allocation3 + $0x20] sm:$0xff]
    %v75 = vld [vmem:[#allocation3 + $0x30] sm:$0xff]
    %v76 = vld [vmem:[#allocation3 + $0x40] sm:$0xff]
    %v77 = vld [vmem:[#allocation3 + $0x50] sm:$0xff]
    %v78 = vld [vmem:[#allocation3 + $0x60] sm:$0xff]
    %v79 = vld [vmem:[#allocation3 + $0x70] sm:$0xff]
    %v80 = vld [vmem:[#allocation3 + $0x80] sm:$0xff]
    %v81 = vld [vmem:[#allocation3 + $0x90] sm:$0xff]
    %v82 = vld [vmem:[#allocation3 + $0xa0] sm:$0xff]
    %v83 = vld [vmem:[#allocation3 + $0xb0] sm:$0xff]
    %v84 = vld [vmem:[#allocation3 + $0xc0] sm:$0xff]
    %v85 = vld [vmem:[#allocation3 + $0xd0] sm:$0xff]
    %v86 = vld [vmem:[#allocation3 + $0xe0] sm:$0xff]
    %v87 = vld [vmem:[#allocation3 + $0xf0] sm:$0xff]
    %v88 = vld [vmem:[#allocation3 + $0x100] sm:$0xff]
    %v89 = vld [vmem:[#allocation3 + $0x110] sm:$0xff]
    %v90 = vld [vmem:[#allocation3 + $0x120] sm:$0xff]
    %v91 = vld [vmem:[#allocation3 + $0x130] sm:$0xff]
    %v92 = vld [vmem:[#allocation3 + $0x140] sm:$0xff]
    %v93 = vld [vmem:[#allocation3 + $0x150] sm:$0xff]
    %v94 = vld [vmem:[#allocation3 + $0x160] sm:$0xff]
    %v95 = vld [vmem:[#allocation3 + $0x170] sm:$0xff]
    %v96 = vld [vmem:[#allocation3 + $0x180] sm:$0xff]
    %v97 = vld [vmem:[#allocation3 + $0x190] sm:$0xff]
    %v98 = vld [vmem:[#allocation3 + $0x1a0] sm:$0xff]
    %v99 = vld [vmem:[#allocation3 + $0x1b0] sm:$0xff]
    %v100 = vld [vmem:[#allocation3 + $0x1c0] sm:$0xff]
    %v101 = vld [vmem:[#allocation3 + $0x1d0] sm:$0xff]
    %v102 = vld [vmem:[#allocation3 + $0x1e0] sm:$0xff]
    %v103 = vld [vmem:[#allocation3 + $0x1f0] sm:$0xff]
    %v104 = vld [vmem:[#allocation3 + $0x200] sm:$0xff]
    %v105 = vld [vmem:[#allocation3 + $0x210] sm:$0xff]
    %v106 = vld [vmem:[#allocation3 + $0x220] sm:$0xff]
    %v107 = vld [vmem:[#allocation3 + $0x230] sm:$0xff]
    %v108 = vld [vmem:[#allocation3 + $0x240] sm:$0xff]
    %v109 = vld [vmem:[#allocation3 + $0x250] sm:$0xff]
    %v110 = vld [vmem:[#allocation3 + $0x260] sm:$0xff]
    %v111 = vld [vmem:[#allocation3 + $0x270] sm:$0xff]
    %v112 = vld [vmem:[#allocation3 + $0x280] sm:$0xff]
    %v113 = vld [vmem:[#allocation3 + $0x290] sm:$0xff]
    %v114 = vld [vmem:[#allocation3 + $0x2a0] sm:$0xff]
    %v115 = vld [vmem:[#allocation3 + $0x2b0] sm:$0xff]
    %v116 = vld [vmem:[#allocation3 + $0x2c0] sm:$0xff]
    %v117 = vld [vmem:[#allocation3 + $0x2d0] sm:$0xff]
    %v118 = vld [vmem:[#allocation3 + $0x2e0] sm:$0xff]
    %v119 = vld [vmem:[#allocation3 + $0x2f0] sm:$0xff]
    %v120 = vld [vmem:[#allocation3 + $0x300] sm:$0xff]
    %v121 = vld [vmem:[#allocation3 + $0x310] sm:$0xff]
    %v122 = vld [vmem:[#allocation3 + $0x320] sm:$0xff]
    %v123 = vld [vmem:[#allocation3 + $0x330] sm:$0xff]
    %v124 = vld [vmem:[#allocation3 + $0x340] sm:$0xff]
    %v125 = vld [vmem:[#allocation3 + $0x350] sm:$0xff]
    %v126 = vld [vmem:[#allocation3 + $0x360] sm:$0xff]
    %v127 = vld [vmem:[#allocation3 + $0x370] sm:$0xff]
    %v128 = vld [vmem:[#allocation3 + $0x380] sm:$0xff]
    %v129 = vld [vmem:[#allocation3 + $0x390] sm:$0xff]
    %v130 = vld [vmem:[#allocation3 + $0x3a0] sm:$0xff]
    %v131 = vld [vmem:[#allocation3 + $0x3b0] sm:$0xff]
    %v132 = vld [vmem:[#allocation3 + $0x3c0] sm:$0xff]
    %v133 = vld [vmem:[#allocation3 + $0x3d0] sm:$0xff]
    %v134 = vld [vmem:[#allocation3 + $0x3e0] sm:$0xff]
    %v135 = vld [vmem:[#allocation3 + $0x3f0] sm:$0xff]
    %v136 = vld [vmem:[#allocation8] sm:$0xff]
    %v137 = vld [vmem:[#allocation8 + $0x8] sm:$0xff]
    %v138 = vperm.slane %v136, 0
    %v139 = vperm.slane %v137, 0
    %v142 = vunpack.c.l.b16 %v56
    %v143 = vunpack.c.h.b16 %v56
    %v144 = vunpack.c.l.b16 %v57
    %v145 = vunpack.c.h.b16 %v57
    %v146 = vpack.c.b16 %v142, %v142
    %v147 = vpack.c.b16 %v143, %v143
    %v148 = vpack.c.b16 %v144, %v144
    %v149 = vpack.c.b16 %v145, %v145
    %v218 = vunpack.c.l.b16 %v72
    %v219 = vunpack.c.h.b16 %v72
    %v220 = vunpack.c.l.b16 %v73
    %v221 = vunpack.c.h.b16 %v73
    %v222 = vunpack.c.l.b16 %v74
    %v223 = vunpack.c.h.b16 %v74
    %v224 = vunpack.c.l.b16 %v75
    %v225 = vunpack.c.h.b16 %v75
    %v226 = vunpack.c.l.b16 %v76
    %v227 = vunpack.c.h.b16 %v76
    %v228 = vunpack.c.l.b16 %v77
    %v229 = vunpack.c.h.b16 %v77
    %v230 = vunpack.c.l.b16 %v78
    %v231 = vunpack.c.h.b16 %v78
    %v232 = vunpack.c.l.b16 %v79
    %v233 = vunpack.c.h.b16 %v79
    %v234 = vunpack.c.l.b16 %v80
    %v235 = vunpack.c.h.b16 %v80
    %v236 = vunpack.c.l.b16 %v81
    %v237 = vunpack.c.h.b16 %v81
    %v238 = vunpack.c.l.b16 %v82
    %v239 = vunpack.c.h.b16 %v82
    %v240 = vunpack.c.l.b16 %v83
    %v241 = vunpack.c.h.b16 %v83
    %v242 = vunpack.c.l.b16 %v84
    %v243 = vunpack.c.h.b16 %v84
    %v244 = vunpack.c.l.b16 %v85
    %v245 = vunpack.c.h.b16 %v85
    %v246 = vunpack.c.l.b16 %v86
    %v247 = vunpack.c.h.b16 %v86
    %v248 = vunpack.c.l.b16 %v87
    %v249 = vunpack.c.h.b16 %v87
    %v250 = vunpack.c.l.b16 %v88
    %v251 = vunpack.c.h.b16 %v88
    %v252 = vunpack.c.l.b16 %v89
    %v253 = vunpack.c.h.b16 %v89
    %v254 = vunpack.c.l.b16 %v90
    %v255 = vunpack.c.h.b16 %v90
    %v256 = vunpack.c.l.b16 %v91
    %v257 = vunpack.c.h.b16 %v91
    %v258 = vunpack.c.l.b16 %v92
    %v259 = vunpack.c.h.b16 %v92
    %v260 = vunpack.c.l.b16 %v93
    %v261 = vunpack.c.h.b16 %v93
    %v262 = vunpack.c.l.b16 %v94
    %v263 = vunpack.c.h.b16 %v94
    %v264 = vunpack.c.l.b16 %v95
    %v265 = vunpack.c.h.b16 %v95
    %v266 = vunpack.c.l.b16 %v96
    %v267 = vunpack.c.h.b16 %v96
    %v268 = vunpack.c.l.b16 %v97
    %v269 = vunpack.c.h.b16 %v97
    %v270 = vunpack.c.l.b16 %v98
    %v271 = vunpack.c.h.b16 %v98
    %v272 = vunpack.c.l.b16 %v99
    %v273 = vunpack.c.h.b16 %v99
    %v274 = vunpack.c.l.b16 %v100
    %v275 = vunpack.c.h.b16 %v100
    %v276 = vunpack.c.l.b16 %v101
    %v277 = vunpack.c.h.b16 %v101
    %v278 = vunpack.c.l.b16 %v102
    %v279 = vunpack.c.h.b16 %v102
    %v280 = vunpack.c.l.b16 %v103
    %v281 = vunpack.c.h.b16 %v103
    %v282 = vunpack.c.l.b16 %v104
    %v283 = vunpack.c.h.b16 %v104
    %v284 = vunpack.c.l.b16 %v105
    %v285 = vunpack.c.h.b16 %v105
    %v286 = vunpack.c.l.b16 %v106
    %v287 = vunpack.c.h.b16 %v106
    %v288 = vunpack.c.l.b16 %v107
    %v289 = vunpack.c.h.b16 %v107
    %v290 = vunpack.c.l.b16 %v108
    %v291 = vunpack.c.h.b16 %v108
    %v292 = vunpack.c.l.b16 %v109
    %v293 = vunpack.c.h.b16 %v109
    %v294 = vunpack.c.l.b16 %v110
    %v295 = vunpack.c.h.b16 %v110
    %v296 = vunpack.c.l.b16 %v111
    %v297 = vunpack.c.h.b16 %v111
    %v298 = vunpack.c.l.b16 %v112
    %v299 = vunpack.c.h.b16 %v112
    %v300 = vunpack.c.l.b16 %v113
    %v301 = vunpack.c.h.b16 %v113
    %v302 = vunpack.c.l.b16 %v114
    %v303 = vunpack.c.h.b16 %v114
    %v304 = vunpack.c.l.b16 %v115
    %v305 = vunpack.c.h.b16 %v115
    %v306 = vunpack.c.l.b16 %v116
    %v307 = vunpack.c.h.b16 %v116
    %v308 = vunpack.c.l.b16 %v117
    %v309 = vunpack.c.h.b16 %v117
    %v310 = vunpack.c.l.b16 %v118
    %v311 = vunpack.c.h.b16 %v118
    %v312 = vunpack.c.l.b16 %v119
    %v313 = vunpack.c.h.b16 %v119
    %v314 = vunpack.c.l.b16 %v120
    %v315 = vunpack.c.h.b16 %v120
    %v316 = vunpack.c.l.b16 %v121
    %v317 = vunpack.c.h.b16 %v121
    %v318 = vunpack.c.l.b16 %v122
    %v319 = vunpack.c.h.b16 %v122
    %v320 = vunpack.c.l.b16 %v123
    %v321 = vunpack.c.h.b16 %v123
    %v322 = vunpack.c.l.b16 %v124
    %v323 = vunpack.c.h.b16 %v124
    %v324 = vunpack.c.l.b16 %v125
    %v325 = vunpack.c.h.b16 %v125
    %v326 = vunpack.c.l.b16 %v126
    %v327 = vunpack.c.h.b16 %v126
    %v328 = vunpack.c.l.b16 %v127
    %v329 = vunpack.c.h.b16 %v127
    %v330 = vunpack.c.l.b16 %v128
    %v331 = vunpack.c.h.b16 %v128
    %v332 = vunpack.c.l.b16 %v129
    %v333 = vunpack.c.h.b16 %v129
    %v334 = vunpack.c.l.b16 %v130
    %v335 = vunpack.c.h.b16 %v130
    %v336 = vunpack.c.l.b16 %v131
    %v337 = vunpack.c.h.b16 %v131
    %v338 = vunpack.c.l.b16 %v132
    %v339 = vunpack.c.h.b16 %v132
    %v340 = vunpack.c.l.b16 %v133
    %v341 = vunpack.c.h.b16 %v133
    %v342 = vunpack.c.l.b16 %v134
    %v343 = vunpack.c.h.b16 %v134
    %v344 = vunpack.c.l.b16 %v135
    %v345 = vunpack.c.h.b16 %v135
    %v346 = vpack.c.b16 %v220, %v218
    %v347 = vpack.c.b16 %v221, %v219
    %v348 = vpack.c.b16 %v224, %v222
    %v349 = vpack.c.b16 %v225, %v223
    %v350 = vpack.c.b16 %v228, %v226
    %v351 = vpack.c.b16 %v229, %v227
    %v352 = vpack.c.b16 %v232, %v230
    %v353 = vpack.c.b16 %v233, %v231
    %v354 = vpack.c.b16 %v236, %v234
    %v355 = vpack.c.b16 %v237, %v235
    %v356 = vpack.c.b16 %v240, %v238
    %v357 = vpack.c.b16 %v241, %v239
    %v358 = vpack.c.b16 %v244, %v242
    %v359 = vpack.c.b16 %v245, %v243
    %v360 = vpack.c.b16 %v248, %v246
    %v361 = vpack.c.b16 %v249, %v247
    %v362 = vpack.c.b16 %v252, %v250
    %v363 = vpack.c.b16 %v253, %v251
    %v364 = vpack.c.b16 %v256, %v254
    %v365 = vpack.c.b16 %v257, %v255
    %v366 = vpack.c.b16 %v260, %v258
    %v367 = vpack.c.b16 %v261, %v259
    %v368 = vpack.c.b16 %v264, %v262
    %v369 = vpack.c.b16 %v265, %v263
    %v370 = vpack.c.b16 %v268, %v266
    %v371 = vpack.c.b16 %v269, %v267
    %v372 = vpack.c.b16 %v272, %v270
    %v373 = vpack.c.b16 %v273, %v271
    %v374 = vpack.c.b16 %v276, %v274
    %v375 = vpack.c.b16 %v277, %v275
    %v376 = vpack.c.b16 %v280, %v278
    %v377 = vpack.c.b16 %v281, %v279
    %v378 = vpack.c.b16 %v284, %v282
    %v379 = vpack.c.b16 %v285, %v283
    %v380 = vpack.c.b16 %v288, %v286
    %v381 = vpack.c.b16 %v289, %v287
    %v382 = vpack.c.b16 %v292, %v290
    %v383 = vpack.c.b16 %v293, %v291
    %v384 = vpack.c.b16 %v296, %v294
    %v385 = vpack.c.b16 %v297, %v295
    %v386 = vpack.c.b16 %v300, %v298
    %v387 = vpack.c.b16 %v301, %v299
    %v388 = vpack.c.b16 %v304, %v302
    %v389 = vpack.c.b16 %v305, %v303
    %v390 = vpack.c.b16 %v308, %v306
    %v391 = vpack.c.b16 %v309, %v307
    %v392 = vpack.c.b16 %v312, %v310
    %v393 = vpack.c.b16 %v313, %v311
    %v394 = vpack.c.b16 %v316, %v314
    %v395 = vpack.c.b16 %v317, %v315
    %v396 = vpack.c.b16 %v320, %v318
    %v397 = vpack.c.b16 %v321, %v319
    %v398 = vpack.c.b16 %v324, %v322
    %v399 = vpack.c.b16 %v325, %v323
    %v400 = vpack.c.b16 %v328, %v326
    %v401 = vpack.c.b16 %v329, %v327
    %v402 = vpack.c.b16 %v332, %v330
    %v403 = vpack.c.b16 %v333, %v331
    %v404 = vpack.c.b16 %v336, %v334
    %v405 = vpack.c.b16 %v337, %v335
    %v406 = vpack.c.b16 %v340, %v338
    %v407 = vpack.c.b16 %v341, %v339
    %v408 = vpack.c.b16 %v344, %v342
    %v409 = vpack.c.b16 %v345, %v343
    %474 = vmatpush.bf16.msra.mxu0 %v360
    %475 = vmatpush.bf16.msra.mxu0 %v358
    %476 = vmatpush.bf16.msra.mxu0 %v356
    %477 = vmatpush.bf16.msra.mxu0 %v354
    %478 = vmatpush.bf16.msra.mxu0 %v352
    %479 = vmatpush.bf16.msra.mxu0 %v350
    %480 = vmatpush.bf16.msra.mxu0 %v348
    %481 = vmatpush.bf16.msra.mxu0 %v346
    %482 = vmatmul.bf16.gmra.mxu0 %v146
    %v483 = vpop.f32.mrf.mxu0
    %v484 = vadd.f32 %v138, %v483
    %v485 = vpop.f32.mrf.mxu0
    %486 = vdwg.mxu0
    %487 = vmatpush.bf16.msra.mxu0 %v376
    %488 = vmatpush.bf16.msra.mxu0 %v374
    %489 = vmatpush.bf16.msra.mxu0 %v372
    %490 = vmatpush.bf16.msra.mxu0 %v370
    %491 = vmatpush.bf16.msra.mxu0 %v368
    %492 = vmatpush.bf16.msra.mxu0 %v366
    %493 = vmatpush.bf16.msra.mxu0 %v364
    %494 = vmatpush.bf16.msra.mxu0 %v362
    %495 = vmatmul.bf16.gmra.mxu0 %v147
    %v496 = vpop.f32.mrf.mxu0
    %v497 = vadd.f32 %v484, %v496
    %v498 = vpop.f32.mrf.mxu0
    %499 = vdwg.mxu0
    %500 = vmatpush.bf16.msra.mxu0 %v392
    %501 = vmatpush.bf16.msra.mxu0 %v390
    %502 = vmatpush.bf16.msra.mxu0 %v388
    %503 = vmatpush.bf16.msra.mxu0 %v386
    %504 = vmatpush.bf16.msra.mxu0 %v384
    %505 = vmatpush.bf16.msra.mxu0 %v382
    %506 = vmatpush.bf16.msra.mxu0 %v380
    %507 = vmatpush.bf16.msra.mxu0 %v378
    %508 = vmatmul.bf16.gmra.mxu0 %v148
    %v509 = vpop.f32.mrf.mxu0
    %v510 = vadd.f32 %v497, %v509
    %v511 = vpop.f32.mrf.mxu0
    %512 = vdwg.mxu0
    %513 = vmatpush.bf16.msra.mxu0 %v408
    %514 = vmatpush.bf16.msra.mxu0 %v406
    %515 = vmatpush.bf16.msra.mxu0 %v404
    %516 = vmatpush.bf16.msra.mxu0 %v402
    %517 = vmatpush.bf16.msra.mxu0 %v400
    %518 = vmatpush.bf16.msra.mxu0 %v398
    %519 = vmatpush.bf16.msra.mxu0 %v396
    %520 = vmatpush.bf16.msra.mxu0 %v394
    %521 = vmatmul.bf16.gmra.mxu0 %v149
    %v522 = vpop.f32.mrf.mxu0
    %v523 = vadd.f32 %v510, %v522
    %v524 = vpop.f32.mrf.mxu0
    %525 = vdwg.mxu0
    %526 = vmatpush.bf16.msra.mxu0 %v361
    %527 = vmatpush.bf16.msra.mxu0 %v359
    %528 = vmatpush.bf16.msra.mxu0 %v357
    %529 = vmatpush.bf16.msra.mxu0 %v355
    %530 = vmatpush.bf16.msra.mxu0 %v353
    %531 = vmatpush.bf16.msra.mxu0 %v351
    %532 = vmatpush.bf16.msra.mxu0 %v349
    %533 = vmatpush.bf16.msra.mxu0 %v347
    %534 = vmatmul.bf16.gmra.mxu0 %v146
    %v535 = vpop.f32.mrf.mxu0
    %v536 = vadd.f32 %v139, %v535
    %v537 = vpop.f32.mrf.mxu0
    %538 = vdwg.mxu0
    %539 = vmatpush.bf16.msra.mxu0 %v377
    %540 = vmatpush.bf16.msra.mxu0 %v375
    %541 = vmatpush.bf16.msra.mxu0 %v373
    %542 = vmatpush.bf16.msra.mxu0 %v371
    %543 = vmatpush.bf16.msra.mxu0 %v369
    %544 = vmatpush.bf16.msra.mxu0 %v367
    %545 = vmatpush.bf16.msra.mxu0 %v365
    %546 = vmatpush.bf16.msra.mxu0 %v363
    %547 = vmatmul.bf16.gmra.mxu0 %v147
    %v548 = vpop.f32.mrf.mxu0
    %v549 = vadd.f32 %v536, %v548
    %v550 = vpop.f32.mrf.mxu0
    %551 = vdwg.mxu0
    %552 = vmatpush.bf16.msra.mxu0 %v393
    %553 = vmatpush.bf16.msra.mxu0 %v391
    %554 = vmatpush.bf16.msra.mxu0 %v389
    %555 = vmatpush.bf16.msra.mxu0 %v387
    %556 = vmatpush.bf16.msra.mxu0 %v385
    %557 = vmatpush.bf16.msra.mxu0 %v383
    %558 = vmatpush.bf16.msra.mxu0 %v381
    %559 = vmatpush.bf16.msra.mxu0 %v379
    %560 = vmatmul.bf16.gmra.mxu0 %v148
    %v561 = vpop.f32.mrf.mxu0
    %v562 = vadd.f32 %v549, %v561
    %v563 = vpop.f32.mrf.mxu0
    %564 = vdwg.mxu0
    %565 = vmatpush.bf16.msra.mxu0 %v409
    %566 = vmatpush.bf16.msra.mxu0 %v407
    %567 = vmatpush.bf16.msra.mxu0 %v405
    %568 = vmatpush.bf16.msra.mxu0 %v403
    %569 = vmatpush.bf16.msra.mxu0 %v401
    %570 = vmatpush.bf16.msra.mxu0 %v399
    %571 = vmatpush.bf16.msra.mxu0 %v397
    %572 = vmatpush.bf16.msra.mxu0 %v395
    %573 = vmatmul.bf16.gmra.mxu0 %v149
    %v574 = vpop.f32.mrf.mxu0
    %v575 = vadd.f32 %v562, %v574
    %v576 = vpop.f32.mrf.mxu0
    %577 = vdwg.mxu0
    %v578 = vmax.f32 %v523, 0.0
    %v579 = vmax.f32 %v575, 0.0
    %v580 = vrot.slane %v578, 4
    %v581 = vadd.f32 %v578, %v580
    %v582 = vrot.slane %v581, 2
    %v583 = vadd.f32 %v581, %v582
    %v584 = vrot.slane %v583, 1
    %v585 = vadd.f32 %v583, %v584
    %v586 = vrot.slane %v579, 4
    %v587 = vadd.f32 %v579, %v586
    %v588 = vrot.slane %v587, 2
    %v589 = vadd.f32 %v587, %v588
    %v590 = vrot.slane %v589, 1
    %v591 = vadd.f32 %v589, %v590
    %v592 = vrcp.pop 8.0
    %v593 = vmul.f32 8.0, %v592
    %v594 = vsub.f32 1.0, %v593
    %v595 = vmul.f32 %v592, %v594
    %v596 = vadd.f32 %v592, %v595
    %vm597 = vweird.f32 %v592
    %v598 = vsel %vm597, %v592, %v596
    %v599 = vmul.f32 %v585, %v598
    %v600 = vmul.f32 %v591, %v598
    %v601 = vsub.f32 %v578, %v599
    %v602 = vsub.f32 %v579, %v600
    %v603 = vmul.f32 %v601, %v601
    %v604 = vmul.f32 %v602, %v602
    %v605 = vrot.slane %v603, 4
    %v606 = vadd.f32 %v603, %v605
    %v607 = vrot.slane %v606, 2
    %v608 = vadd.f32 %v606, %v607
    %v609 = vrot.slane %v608, 1
    %v610 = vadd.f32 %v608, %v609
    %v611 = vrot.slane %v604, 4
    %v612 = vadd.f32 %v604, %v611
    %v613 = vrot.slane %v612, 2
    %v614 = vadd.f32 %v612, %v613
    %v615 = vrot.slane %v614, 1
    %v616 = vadd.f32 %v614, %v615
    %v617 = vmul.f32 %v610, %v598
    %v618 = vmul.f32 %v616, %v598
    %v619 = vadd.f32 %v617, 1e-05
    %v620 = vadd.f32 %v618, 1e-05
    %v621 = vrsqrt.pop %v619
    %v622 = vmul.f32 %v621, %v619
    %v623 = vmul.f32 %v622, %v621
    %v624 = vmul.f32 0.5, %v623
    %v625 = vsub.f32 1.5, %v624
    %v626 = vmul.f32 %v621, %v625
    %vm627 = vweird.f32 %v619
    %vm628 = vweird.f32 %v621
    %vm629 = vmor %vm627, %vm628
    %v630 = vsel %vm629, %v621, %v626
    %v631 = vrsqrt.pop %v620
    %v632 = vmul.f32 %v631, %v620
    %v633 = vmul.f32 %v632, %v631
    %v634 = vmul.f32 0.5, %v633
    %v635 = vsub.f32 1.5, %v634
    %v636 = vmul.f32 %v631, %v635
    %vm637 = vweird.f32 %v620
    %vm638 = vweird.f32 %v631
    %vm639 = vmor %vm637, %vm638
    %v640 = vsel %vm639, %v631, %v636
    %v641 = vmul.f32 %v601, %v630
    %v642 = vmul.f32 %v602, %v640
    %v643 = vperm.slane %v136, 1
    %v644 = vperm.slane %v137, 1
    %v645 = vmul.f32 %v641, %v643
    %v646 = vmul.f32 %v642, %v644
    %v647 = vperm.slane %v136, 2
    %v648 = vperm.slane %v137, 2
    %v649 = vadd.f32 %v645, %v647
    %v650 = vadd.f32 %v646, %v648
    %v651 = vpack.c.bf16 %v650, %v649
    %652 = vst [vmem:[#allocation2] sm:$0xff] %v651
    %v653 = vld [vmem:[#allocation2] sm:$0xff]
    %s654 = sshll.u32 %s4, 4
    %s655 = int_to_ptr.hbm [resolvable:$true] %s654
    %s656 = sshll.u32 [#allocation3], 4
    %s657 = int_to_ptr.vmem [resolvable:$true] %s656
    %661 = dma.hbm_to_vmem [thread:$0]  %s655, 1024, %s657, [#allocation4], 64, 256, 4
    %s662 = smul.u32 4, 32
    %s663 = smul.u32 %s662, 1
    %s664 = sshll.u32 %s663, 4
    %665 = dma.done %s59, %s664
    %v666 = vld [vmem:[%s58] sm:$0xf]
    %v667 = vld [vmem:[%s58 + $0x10] sm:$0xf]
    %v668 = vld [vmem:[%s58 + $0x20] sm:$0xf]
    %v669 = vld [vmem:[%s58 + $0x30] sm:$0xf]
    %v670 = vld [vmem:[%s58 + $0x40] sm:$0xf]
    %v671 = vld [vmem:[%s58 + $0x50] sm:$0xf]
    %v672 = vld [vmem:[%s58 + $0x60] sm:$0xf]
    %v673 = vld [vmem:[%s58 + $0x70] sm:$0xf]
    %v674 = vld [vmem:[%s58 + $0x80] sm:$0xf]
    %v675 = vld [vmem:[%s58 + $0x90] sm:$0xf]
    %v676 = vld [vmem:[%s58 + $0xa0] sm:$0xf]
    %v677 = vld [vmem:[%s58 + $0xb0] sm:$0xf]
    %v678 = vld [vmem:[%s58 + $0xc0] sm:$0xf]
    %v679 = vld [vmem:[%s58 + $0xd0] sm:$0xf]
    %v680 = vld [vmem:[%s58 + $0xe0] sm:$0xf]
    %v681 = vld [vmem:[%s58 + $0xf0] sm:$0xf]
    %v682 = vld [vmem:[%s58 + $0x100] sm:$0xf]
    %v683 = vld [vmem:[%s58 + $0x110] sm:$0xf]
    %v684 = vld [vmem:[%s58 + $0x120] sm:$0xf]
    %v685 = vld [vmem:[%s58 + $0x130] sm:$0xf]
    %v686 = vld [vmem:[%s58 + $0x140] sm:$0xf]
    %v687 = vld [vmem:[%s58 + $0x150] sm:$0xf]
    %v688 = vld [vmem:[%s58 + $0x160] sm:$0xf]
    %v689 = vld [vmem:[%s58 + $0x170] sm:$0xf]
    %v690 = vld [vmem:[%s58 + $0x180] sm:$0xf]
    %v691 = vld [vmem:[%s58 + $0x190] sm:$0xf]
    %v692 = vld [vmem:[%s58 + $0x1a0] sm:$0xf]
    %v693 = vld [vmem:[%s58 + $0x1b0] sm:$0xf]
    %v694 = vld [vmem:[%s58 + $0x1c0] sm:$0xf]
    %v695 = vld [vmem:[%s58 + $0x1d0] sm:$0xf]
    %v696 = vld [vmem:[%s58 + $0x1e0] sm:$0xf]
    %v697 = vld [vmem:[%s58 + $0x1f0] sm:$0xf]
    %v698 = vld [vmem:[#allocation8 + $0x20] sm:$0xff]
    %v699 = vperm.slane %v698, 0
    %v701 = vunpack.c.l.b16 %v653
    %v702 = vunpack.c.h.b16 %v653
    %v703 = vpack.c.b16 %v701, %v701
    %v704 = vpack.c.b16 %v702, %v702
    %v739 = vunpack.c.l.b16 %v666
    %v740 = vunpack.c.l.b16 %v667
    %v741 = vunpack.c.l.b16 %v668
    %v742 = vunpack.c.l.b16 %v669
    %v743 = vunpack.c.l.b16 %v670
    %v744 = vunpack.c.l.b16 %v671
    %v745 = vunpack.c.l.b16 %v672
    %v746 = vunpack.c.l.b16 %v673
    %v747 = vunpack.c.l.b16 %v674
    %v748 = vunpack.c.l.b16 %v675
    %v749 = vunpack.c.l.b16 %v676
    %v750 = vunpack.c.l.b16 %v677
    %v751 = vunpack.c.l.b16 %v678
    %v752 = vunpack.c.l.b16 %v679
    %v753 = vunpack.c.l.b16 %v680
    %v754 = vunpack.c.l.b16 %v681
    %v755 = vunpack.c.l.b16 %v682
    %v756 = vunpack.c.l.b16 %v683
    %v757 = vunpack.c.l.b16 %v684
    %v758 = vunpack.c.l.b16 %v685
    %v759 = vunpack.c.l.b16 %v686
    %v760 = vunpack.c.l.b16 %v687
    %v761 = vunpack.c.l.b16 %v688
    %v762 = vunpack.c.l.b16 %v689
    %v763 = vunpack.c.l.b16 %v690
    %v764 = vunpack.c.l.b16 %v691
    %v765 = vunpack.c.l.b16 %v692
    %v766 = vunpack.c.l.b16 %v693
    %v767 = vunpack.c.l.b16 %v694
    %v768 = vunpack.c.l.b16 %v695
    %v769 = vunpack.c.l.b16 %v696
    %v770 = vunpack.c.l.b16 %v697
    %v771 = vpack.c.b16 %v740, %v739
    %v772 = vpack.c.b16 %v742, %v741
    %v773 = vpack.c.b16 %v744, %v743
    %v774 = vpack.c.b16 %v746, %v745
    %v775 = vpack.c.b16 %v748, %v747
    %v776 = vpack.c.b16 %v750, %v749
    %v777 = vpack.c.b16 %v752, %v751
    %v778 = vpack.c.b16 %v754, %v753
    %v779 = vpack.c.b16 %v756, %v755
    %v780 = vpack.c.b16 %v758, %v757
    %v781 = vpack.c.b16 %v760, %v759
    %v782 = vpack.c.b16 %v762, %v761
    %v783 = vpack.c.b16 %v764, %v763
    %v784 = vpack.c.b16 %v766, %v765
    %v785 = vpack.c.b16 %v768, %v767
    %v786 = vpack.c.b16 %v770, %v769
    %803 = vmatpush.bf16.msra.mxu0 %v778
    %804 = vmatpush.bf16.msra.mxu0 %v777
    %805 = vmatpush.bf16.msra.mxu0 %v776
    %806 = vmatpush.bf16.msra.mxu0 %v775
    %807 = vmatpush.bf16.msra.mxu0 %v774
    %808 = vmatpush.bf16.msra.mxu0 %v773
    %809 = vmatpush.bf16.msra.mxu0 %v772
    %810 = vmatpush.bf16.msra.mxu0 %v771
    %811 = vmatmul.bf16.gmra.mxu0 %v703
    %v812 = vpop.f32.mrf.mxu0
    %v813 = vadd.f32 %v699, %v812
    %v814 = vpop.f32.mrf.mxu0
    %815 = vdwg.mxu0
    %816 = vmatpush.bf16.msra.mxu0 %v786
    %817 = vmatpush.bf16.msra.mxu0 %v785
    %818 = vmatpush.bf16.msra.mxu0 %v784
    %819 = vmatpush.bf16.msra.mxu0 %v783
    %820 = vmatpush.bf16.msra.mxu0 %v782
    %821 = vmatpush.bf16.msra.mxu0 %v781
    %822 = vmatpush.bf16.msra.mxu0 %v780
    %823 = vmatpush.bf16.msra.mxu0 %v779
    %824 = vmatmul.bf16.gmra.mxu0 %v704
    %v825 = vpop.f32.mrf.mxu0
    %v826 = vadd.f32 %v813, %v825
    %v827 = vpop.f32.mrf.mxu0
    %828 = vdwg.mxu0
    %v829 = vmax.f32 %v826, 0.0
    %v830 = vrot.slane %v829, 4
    %v831 = vadd.f32 %v829, %v830
    %v832 = vrot.slane %v831, 2
    %v833 = vadd.f32 %v831, %v832
    %v834 = vrot.slane %v833, 1
    %v835 = vadd.f32 %v833, %v834
    %v836 = vmul.f32 %v835, %v598
    %v837 = vsub.f32 %v829, %v836
    %v838 = vmul.f32 %v837, %v837
    %v839 = vrot.slane %v838, 4
    %v840 = vadd.f32 %v838, %v839
    %v841 = vrot.slane %v840, 2
    %v842 = vadd.f32 %v840, %v841
    %v843 = vrot.slane %v842, 1
    %v844 = vadd.f32 %v842, %v843
    %v845 = vmul.f32 %v844, %v598
    %v846 = vadd.f32 %v845, 1e-05
    %v847 = vrsqrt.pop %v846
    %v848 = vmul.f32 %v847, %v846
    %v849 = vmul.f32 %v848, %v847
    %v850 = vmul.f32 0.5, %v849
    %v851 = vsub.f32 1.5, %v850
    %v852 = vmul.f32 %v847, %v851
    %vm853 = vweird.f32 %v846
    %vm854 = vweird.f32 %v847
    %vm855 = vmor %vm853, %vm854
    %v856 = vsel %vm855, %v847, %v852
    %v857 = vmul.f32 %v837, %v856
    %v858 = vperm.slane %v698, 1
    %v859 = vmul.f32 %v857, %v858
    %v860 = vperm.slane %v698, 2
    %v861 = vadd.f32 %v859, %v860
    %v862 = vpack.c.bf16 %v861, %v861
    %s863 = scalar_lea.vmem [#allocation2], 16
    %864 = vst [vmem:[%s863] sm:$0xf] %v862
    %v865 = vld [vmem:[%s863] sm:$0xf]
    %s866 = sshll.u32 %s5, 4
    %s867 = int_to_ptr.hbm [resolvable:$true] %s866
    %s868 = sshll.u32 %s58, 4
    %s869 = int_to_ptr.vmem [resolvable:$true] %s868
    %873 = dma.hbm_to_vmem [thread:$0]  %s867, 1024, %s869, %s59, 64, 256, 4
    %s874 = smul.u32 4, 16
    %s875 = smul.u32 %s874, 1
    %s876 = sshll.u32 %s875, 4
    %877 = dma.done [#allocation4], %s876
    %v878 = vld [vmem:[#allocation3] sm:$0xf]
    %v879 = vld [vmem:[#allocation3 + $0x10] sm:$0xf]
    %v880 = vld [vmem:[#allocation3 + $0x20] sm:$0xf]
    %v881 = vld [vmem:[#allocation3 + $0x30] sm:$0xf]
    %v882 = vld [vmem:[#allocation3 + $0x40] sm:$0xf]
    %v883 = vld [vmem:[#allocation3 + $0x50] sm:$0xf]
    %v884 = vld [vmem:[#allocation3 + $0x60] sm:$0xf]
    %v885 = vld [vmem:[#allocation3 + $0x70] sm:$0xf]
    %v886 = vld [vmem:[#allocation3 + $0x80] sm:$0xf]
    %v887 = vld [vmem:[#allocation3 + $0x90] sm:$0xf]
    %v888 = vld [vmem:[#allocation3 + $0xa0] sm:$0xf]
    %v889 = vld [vmem:[#allocation3 + $0xb0] sm:$0xf]
    %v890 = vld [vmem:[#allocation3 + $0xc0] sm:$0xf]
    %v891 = vld [vmem:[#allocation3 + $0xd0] sm:$0xf]
    %v892 = vld [vmem:[#allocation3 + $0xe0] sm:$0xf]
    %v893 = vld [vmem:[#allocation3 + $0xf0] sm:$0xf]
    %v894 = vld [vmem:[#allocation8 + $0x40] sm:$0xff]
    %v895 = vperm.slane %v894, 0
    %v912 = vunpack.c.l.b16 %v878
    %v913 = vunpack.c.l.b16 %v879
    %v914 = vunpack.c.l.b16 %v880
    %v915 = vunpack.c.l.b16 %v881
    %v916 = vunpack.c.l.b16 %v882
    %v917 = vunpack.c.l.b16 %v883
    %v918 = vunpack.c.l.b16 %v884
    %v919 = vunpack.c.l.b16 %v885
    %v920 = vunpack.c.l.b16 %v886
    %v921 = vunpack.c.l.b16 %v887
    %v922 = vunpack.c.l.b16 %v888
    %v923 = vunpack.c.l.b16 %v889
    %v924 = vunpack.c.l.b16 %v890
    %v925 = vunpack.c.l.b16 %v891
    %v926 = vunpack.c.l.b16 %v892
    %v927 = vunpack.c.l.b16 %v893
    %v928 = vpack.c.b16 %v913, %v912
    %v929 = vpack.c.b16 %v915, %v914
    %v930 = vpack.c.b16 %v917, %v916
    %v931 = vpack.c.b16 %v919, %v918
    %v932 = vpack.c.b16 %v921, %v920
    %v933 = vpack.c.b16 %v923, %v922
    %v934 = vpack.c.b16 %v925, %v924
    %v935 = vpack.c.b16 %v927, %v926
    %944 = vmatpush.bf16.msra.mxu0 %v935
    %945 = vmatpush.bf16.msra.mxu0 %v934
    %946 = vmatpush.bf16.msra.mxu0 %v933
    %947 = vmatpush.bf16.msra.mxu0 %v932
    %948 = vmatpush.bf16.msra.mxu0 %v931
    %949 = vmatpush.bf16.msra.mxu0 %v930
    %950 = vmatpush.bf16.msra.mxu0 %v929
    %951 = vmatpush.bf16.msra.mxu0 %v928
    %952 = vmatmul.bf16.gmra.mxu0 %v865
    %v953 = vpop.f32.mrf.mxu0
    %v954 = vadd.f32 %v895, %v953
    %v955 = vpop.f32.mrf.mxu0
    %956 = vdwg.mxu0
    %v957 = vmax.f32 %v954, 0.0
    %v958 = vrot.slane %v957, 4
    %v959 = vadd.f32 %v957, %v958
    %v960 = vrot.slane %v959, 2
    %v961 = vadd.f32 %v959, %v960
    %v962 = vrot.slane %v961, 1
    %v963 = vadd.f32 %v961, %v962
    %v964 = vmul.f32 %v963, %v598
    %v965 = vsub.f32 %v957, %v964
    %v966 = vmul.f32 %v965, %v965
    %v967 = vrot.slane %v966, 4
    %v968 = vadd.f32 %v966, %v967
    %v969 = vrot.slane %v968, 2
    %v970 = vadd.f32 %v968, %v969
    %v971 = vrot.slane %v970, 1
    %v972 = vadd.f32 %v970, %v971
    %v973 = vmul.f32 %v972, %v598
    %v974 = vadd.f32 %v973, 1e-05
    %v975 = vrsqrt.pop %v974
    %v976 = vmul.f32 %v975, %v974
    %v977 = vmul.f32 %v976, %v975
    %v978 = vmul.f32 0.5, %v977
    %v979 = vsub.f32 1.5, %v978
    %v980 = vmul.f32 %v975, %v979
    %vm981 = vweird.f32 %v974
    %vm982 = vweird.f32 %v975
    %vm983 = vmor %vm981, %vm982
    %v984 = vsel %vm983, %v975, %v980
    %v985 = vmul.f32 %v965, %v984
    %v986 = vperm.slane %v894, 1
    %v987 = vmul.f32 %v985, %v986
    %v988 = vperm.slane %v894, 2
    %v989 = vadd.f32 %v987, %v988
    %v990 = vpack.c.bf16 %v989, %v989
    %991 = vst [vmem:[#allocation2] sm:$0xf] %v990
    %v992 = vld [vmem:[#allocation2] sm:$0xf]
    %s993 = sshll.u32 %s6, 4
    %s994 = int_to_ptr.hbm [resolvable:$true] %s993
    %s995 = sshll.u32 [#allocation3], 4
    %s996 = int_to_ptr.vmem [resolvable:$true] %s995
    %1000 = dma.hbm_to_vmem [thread:$0]  %s994, 2048, %s996, [#allocation4], 128, 256, 8
    %s1001 = sshll.u32 %s875, 4
    %1002 = dma.done %s59, %s1001
    %v1003 = vld [vmem:[%s58] sm:$0xf]
    %v1004 = vld [vmem:[%s58 + $0x10] sm:$0xf]
    %v1005 = vld [vmem:[%s58 + $0x20] sm:$0xf]
    %v1006 = vld [vmem:[%s58 + $0x30] sm:$0xf]
    %v1007 = vld [vmem:[%s58 + $0x40] sm:$0xf]
    %v1008 = vld [vmem:[%s58 + $0x50] sm:$0xf]
    %v1009 = vld [vmem:[%s58 + $0x60] sm:$0xf]
    %v1010 = vld [vmem:[%s58 + $0x70] sm:$0xf]
    %v1011 = vld [vmem:[%s58 + $0x80] sm:$0xf]
    %v1012 = vld [vmem:[%s58 + $0x90] sm:$0xf]
    %v1013 = vld [vmem:[%s58 + $0xa0] sm:$0xf]
    %v1014 = vld [vmem:[%s58 + $0xb0] sm:$0xf]
    %v1015 = vld [vmem:[%s58 + $0xc0] sm:$0xf]
    %v1016 = vld [vmem:[%s58 + $0xd0] sm:$0xf]
    %v1017 = vld [vmem:[%s58 + $0xe0] sm:$0xf]
    %v1018 = vld [vmem:[%s58 + $0xf0] sm:$0xf]
    %v1019 = vld [vmem:[#allocation8 + $0x60] sm:$0xff]
    %v1020 = vperm.slane %v1019, 0
    %v1037 = vunpack.c.l.b16 %v1003
    %v1038 = vunpack.c.l.b16 %v1004
    %v1039 = vunpack.c.l.b16 %v1005
    %v1040 = vunpack.c.l.b16 %v1006
    %v1041 = vunpack.c.l.b16 %v1007
    %v1042 = vunpack.c.l.b16 %v1008
    %v1043 = vunpack.c.l.b16 %v1009
    %v1044 = vunpack.c.l.b16 %v1010
    %v1045 = vunpack.c.l.b16 %v1011
    %v1046 = vunpack.c.l.b16 %v1012
    %v1047 = vunpack.c.l.b16 %v1013
    %v1048 = vunpack.c.l.b16 %v1014
    %v1049 = vunpack.c.l.b16 %v1015
    %v1050 = vunpack.c.l.b16 %v1016
    %v1051 = vunpack.c.l.b16 %v1017
    %v1052 = vunpack.c.l.b16 %v1018
    %v1053 = vpack.c.b16 %v1038, %v1037
    %v1054 = vpack.c.b16 %v1040, %v1039
    %v1055 = vpack.c.b16 %v1042, %v1041
    %v1056 = vpack.c.b16 %v1044, %v1043
    %v1057 = vpack.c.b16 %v1046, %v1045
    %v1058 = vpack.c.b16 %v1048, %v1047
    %v1059 = vpack.c.b16 %v1050, %v1049
    %v1060 = vpack.c.b16 %v1052, %v1051
    %1069 = vmatpush.bf16.msra.mxu0 %v1060
    %1070 = vmatpush.bf16.msra.mxu0 %v1059
    %1071 = vmatpush.bf16.msra.mxu0 %v1058
    %1072 = vmatpush.bf16.msra.mxu0 %v1057
    %1073 = vmatpush.bf16.msra.mxu0 %v1056
    %1074 = vmatpush.bf16.msra.mxu0 %v1055
    %1075 = vmatpush.bf16.msra.mxu0 %v1054
    %1076 = vmatpush.bf16.msra.mxu0 %v1053
    %1077 = vmatmul.bf16.gmra.mxu0 %v992
    %v1078 = vpop.f32.mrf.mxu0
    %v1079 = vadd.f32 %v1020, %v1078
    %v1080 = vpop.f32.mrf.mxu0
    %1081 = vdwg.mxu0
    %v1082 = vmax.f32 %v1079, 0.0
    %v1083 = vrot.slane %v1082, 4
    %v1084 = vadd.f32 %v1082, %v1083
    %v1085 = vrot.slane %v1084, 2
    %v1086 = vadd.f32 %v1084, %v1085
    %v1087 = vrot.slane %v1086, 1
    %v1088 = vadd.f32 %v1086, %v1087
    %v1089 = vmul.f32 %v1088, %v598
    %v1090 = vsub.f32 %v1082, %v1089
    %v1091 = vmul.f32 %v1090, %v1090
    %v1092 = vrot.slane %v1091, 4
    %v1093 = vadd.f32 %v1091, %v1092
    %v1094 = vrot.slane %v1093, 2
    %v1095 = vadd.f32 %v1093, %v1094
    %v1096 = vrot.slane %v1095, 1
    %v1097 = vadd.f32 %v1095, %v1096
    %v1098 = vmul.f32 %v1097, %v598
    %v1099 = vadd.f32 %v1098, 1e-05
    %v1100 = vrsqrt.pop %v1099
    %v1101 = vmul.f32 %v1100, %v1099
    %v1102 = vmul.f32 %v1101, %v1100
    %v1103 = vmul.f32 0.5, %v1102
    %v1104 = vsub.f32 1.5, %v1103
    %v1105 = vmul.f32 %v1100, %v1104
    %vm1106 = vweird.f32 %v1099
    %vm1107 = vweird.f32 %v1100
    %vm1108 = vmor %vm1106, %vm1107
    %v1109 = vsel %vm1108, %v1100, %v1105
    %v1110 = vmul.f32 %v1090, %v1109
    %v1111 = vperm.slane %v1019, 1
    %v1112 = vmul.f32 %v1110, %v1111
    %v1113 = vperm.slane %v1019, 2
    %v1114 = vadd.f32 %v1112, %v1113
    %v1115 = vpack.c.bf16 %v1114, %v1114
    %1116 = vst [vmem:[%s863] sm:$0xf] %v1115
    %v1117 = vld [vmem:[%s863] sm:$0xf]
    // Predicated region
    $region18: #{tpu_custom_call.1} parent=1 // pred_check
      _
    $region19: #{tpu_custom_call.1} parent=1 // pred_check_branch
      %1119 = sbr.rel target = $region21
    $region20: #{tpu_custom_call.1} parent=1 // pred_region
      %1120 = sst [smem:[#allocation18]] [#allocation17]
      %1121 = sst [smem:[#allocation19]] [#allocation16]
    $region21: #{tpu_custom_call.1} parent=1 // pred_fallthru
      _
    %1123 = shalt.err (0)
    %s1125 = sshll.u32 %s7, 4
    %s1126 = int_to_ptr.hbm [resolvable:$true] %s1125
    %s1127 = sshll.u32 %s58, 4
    %s1128 = int_to_ptr.vmem [resolvable:$true] %s1127
    %1130 = dma.hbm_to_vmem [thread:$0]  %s1126, 8192, %s1128, %s59
    %s1131 = smul.u32 %s874, 2
    %s1132 = sshll.u32 %s1131, 4
    %1133 = dma.done [#allocation4], %s1132
    %v1134 = vld [vmem:[#allocation3] sm:$0xff]
    %v1135 = vld [vmem:[#allocation3 + $0x10] sm:$0xff]
    %v1136 = vld [vmem:[#allocation3 + $0x20] sm:$0xff]
    %v1137 = vld [vmem:[#allocation3 + $0x30] sm:$0xff]
    %v1138 = vld [vmem:[#allocation3 + $0x40] sm:$0xff]
    %v1139 = vld [vmem:[#allocation3 + $0x50] sm:$0xff]
    %v1140 = vld [vmem:[#allocation3 + $0x60] sm:$0xff]
    %v1141 = vld [vmem:[#allocation3 + $0x70] sm:$0xff]
    %v1142 = vld [vmem:[#allocation3 + $0x80] sm:$0xff]
    %v1143 = vld [vmem:[#allocation3 + $0x90] sm:$0xff]
    %v1144 = vld [vmem:[#allocation3 + $0xa0] sm:$0xff]
    %v1145 = vld [vmem:[#allocation3 + $0xb0] sm:$0xff]
    %v1146 = vld [vmem:[#allocation3 + $0xc0] sm:$0xff]
    %v1147 = vld [vmem:[#allocation3 + $0xd0] sm:$0xff]
    %v1148 = vld [vmem:[#allocation3 + $0xe0] sm:$0xff]
    %v1149 = vld [vmem:[#allocation3 + $0xf0] sm:$0xff]
    %v1150 = vld [vmem:[#allocation8 + $0x80] sm:$0xff]
    %v1151 = vld [vmem:[#allocation8 + $0x88] sm:$0xff]
    %v1152 = vperm.slane %v1150, 0
    %v1153 = vperm.slane %v1151, 0
    %v1170 = vunpack.c.l.b16 %v1134
    %v1171 = vunpack.c.h.b16 %v1134
    %v1172 = vunpack.c.l.b16 %v1135
    %v1173 = vunpack.c.h.b16 %v1135
    %v1174 = vunpack.c.l.b16 %v1136
    %v1175 = vunpack.c.h.b16 %v1136
    %v1176 = vunpack.c.l.b16 %v1137
    %v1177 = vunpack.c.h.b16 %v1137
    %v1178 = vunpack.c.l.b16 %v1138
    %v1179 = vunpack.c.h.b16 %v1138
    %v1180 = vunpack.c.l.b16 %v1139
    %v1181 = vunpack.c.h.b16 %v1139
    %v1182 = vunpack.c.l.b16 %v1140
    %v1183 = vunpack.c.h.b16 %v1140
    %v1184 = vunpack.c.l.b16 %v1141
    %v1185 = vunpack.c.h.b16 %v1141
    %v1186 = vunpack.c.l.b16 %v1142
    %v1187 = vunpack.c.h.b16 %v1142
    %v1188 = vunpack.c.l.b16 %v1143
    %v1189 = vunpack.c.h.b16 %v1143
    %v1190 = vunpack.c.l.b16 %v1144
    %v1191 = vunpack.c.h.b16 %v1144
    %v1192 = vunpack.c.l.b16 %v1145
    %v1193 = vunpack.c.h.b16 %v1145
    %v1194 = vunpack.c.l.b16 %v1146
    %v1195 = vunpack.c.h.b16 %v1146
    %v1196 = vunpack.c.l.b16 %v1147
    %v1197 = vunpack.c.h.b16 %v1147
    %v1198 = vunpack.c.l.b16 %v1148
    %v1199 = vunpack.c.h.b16 %v1148
    %v1200 = vunpack.c.l.b16 %v1149
    %v1201 = vunpack.c.h.b16 %v1149
    %v1202 = vpack.c.b16 %v1172, %v1170
    %v1203 = vpack.c.b16 %v1173, %v1171
    %v1204 = vpack.c.b16 %v1176, %v1174
    %v1205 = vpack.c.b16 %v1177, %v1175
    %v1206 = vpack.c.b16 %v1180, %v1178
    %v1207 = vpack.c.b16 %v1181, %v1179
    %v1208 = vpack.c.b16 %v1184, %v1182
    %v1209 = vpack.c.b16 %v1185, %v1183
    %v1210 = vpack.c.b16 %v1188, %v1186
    %v1211 = vpack.c.b16 %v1189, %v1187
    %v1212 = vpack.c.b16 %v1192, %v1190
    %v1213 = vpack.c.b16 %v1193, %v1191
    %v1214 = vpack.c.b16 %v1196, %v1194
    %v1215 = vpack.c.b16 %v1197, %v1195
    %v1216 = vpack.c.b16 %v1200, %v1198
    %v1217 = vpack.c.b16 %v1201, %v1199
    %1234 = vmatpush.bf16.msra.mxu0 %v1216
    %1235 = vmatpush.bf16.msra.mxu0 %v1214
    %1236 = vmatpush.bf16.msra.mxu0 %v1212
    %1237 = vmatpush.bf16.msra.mxu0 %v1210
    %1238 = vmatpush.bf16.msra.mxu0 %v1208
    %1239 = vmatpush.bf16.msra.mxu0 %v1206
    %1240 = vmatpush.bf16.msra.mxu0 %v1204
    %1241 = vmatpush.bf16.msra.mxu0 %v1202
    %1242 = vmatmul.bf16.gmra.mxu0 %v1117
    %v1243 = vpop.f32.mrf.mxu0
    %v1244 = vadd.f32 %v1152, %v1243
    %v1245 = vpop.f32.mrf.mxu0
    %1246 = vdwg.mxu0
    %1247 = vmatpush.bf16.msra.mxu0 %v1217
    %1248 = vmatpush.bf16.msra.mxu0 %v1215
    %1249 = vmatpush.bf16.msra.mxu0 %v1213
    %1250 = vmatpush.bf16.msra.mxu0 %v1211
    %1251 = vmatpush.bf16.msra.mxu0 %v1209
    %1252 = vmatpush.bf16.msra.mxu0 %v1207
    %1253 = vmatpush.bf16.msra.mxu0 %v1205
    %1254 = vmatpush.bf16.msra.mxu0 %v1203
    %1255 = vmatmul.bf16.gmra.mxu0 %v1117
    %v1256 = vpop.f32.mrf.mxu0
    %v1257 = vadd.f32 %v1153, %v1256
    %v1258 = vpop.f32.mrf.mxu0
    %1259 = vdwg.mxu0
    %v1260 = vmax.f32 %v1244, 0.0
    %v1261 = vmax.f32 %v1257, 0.0
    %v1262 = vrot.slane %v1260, 4
    %v1263 = vadd.f32 %v1260, %v1262
    %v1264 = vrot.slane %v1263, 2
    %v1265 = vadd.f32 %v1263, %v1264
    %v1266 = vrot.slane %v1265, 1
    %v1267 = vadd.f32 %v1265, %v1266
    %v1268 = vrot.slane %v1261, 4
    %v1269 = vadd.f32 %v1261, %v1268
    %v1270 = vrot.slane %v1269, 2
    %v1271 = vadd.f32 %v1269, %v1270
    %v1272 = vrot.slane %v1271, 1
    %v1273 = vadd.f32 %v1271, %v1272
    %v1274 = vmul.f32 %v1267, %v598
    %v1275 = vmul.f32 %v1273, %v598
    %v1276 = vsub.f32 %v1260, %v1274
    %v1277 = vsub.f32 %v1261, %v1275
    %v1278 = vmul.f32 %v1276, %v1276
    %v1279 = vmul.f32 %v1277, %v1277
    %v1280 = vrot.slane %v1278, 4
    %v1281 = vadd.f32 %v1278, %v1280
    %v1282 = vrot.slane %v1281, 2
    %v1283 = vadd.f32 %v1281, %v1282
    %v1284 = vrot.slane %v1283, 1
    %v1285 = vadd.f32 %v1283, %v1284
    %v1286 = vrot.slane %v1279, 4
    %v1287 = vadd.f32 %v1279, %v1286
    %v1288 = vrot.slane %v1287, 2
    %v1289 = vadd.f32 %v1287, %v1288
    %v1290 = vrot.slane %v1289, 1
    %v1291 = vadd.f32 %v1289, %v1290
    %v1292 = vmul.f32 %v1285, %v598
    %v1293 = vmul.f32 %v1291, %v598
    %v1294 = vadd.f32 %v1292, 1e-05
    %v1295 = vadd.f32 %v1293, 1e-05
    %v1296 = vrsqrt.pop %v1294
    %v1297 = vmul.f32 %v1296, %v1294
    %v1298 = vmul.f32 %v1297, %v1296
    %v1299 = vmul.f32 0.5, %v1298
    %v1300 = vsub.f32 1.5, %v1299
    %v1301 = vmul.f32 %v1296, %v1300
    %vm1302 = vweird.f32 %v1294
    %vm1303 = vweird.f32 %v1296
    %vm1304 = vmor %vm1302, %vm1303
    %v1305 = vsel %vm1304, %v1296, %v1301
    %v1306 = vrsqrt.pop %v1295
    %v1307 = vmul.f32 %v1306, %v1295
    %v1308 = vmul.f32 %v1307, %v1306
    %v1309 = vmul.f32 0.5, %v1308
    %v1310 = vsub.f32 1.5, %v1309
    %v1311 = vmul.f32 %v1306, %v1310
    %vm1312 = vweird.f32 %v1295
    %vm1313 = vweird.f32 %v1306
    %vm1314 = vmor %vm1312, %vm1313
    %v1315 = vsel %vm1314, %v1306, %v1311
    %v1316 = vmul.f32 %v1276, %v1305
    %v1317 = vmul.f32 %v1277, %v1315
    %v1318 = vperm.slane %v1150, 1
    %v1319 = vperm.slane %v1151, 1
    %v1320 = vmul.f32 %v1316, %v1318
    %v1321 = vmul.f32 %v1317, %v1319
    %v1322 = vperm.slane %v1150, 2
    %v1323 = vperm.slane %v1151, 2
    %v1324 = vadd.f32 %v1320, %v1322
    %v1325 = vadd.f32 %v1321, %v1323
    %v1326 = vpack.c.bf16 %v1325, %v1324
    %1327 = vst [vmem:[#allocation2] sm:$0xff] %v1326
    %v1328 = vld [vmem:[#allocation2] sm:$0xff]
    %s1329 = smul.u32 %s662, 4
    %s1330 = sshll.u32 %s1329, 4
    %1331 = dma.done %s59, %s1330
    %v1332 = vld [vmem:[%s58] sm:$0xff]
    %v1333 = vld [vmem:[%s58 + $0x8] sm:$0xff]
    %v1334 = vld [vmem:[%s58 + $0x10] sm:$0xff]
    %v1335 = vld [vmem:[%s58 + $0x18] sm:$0xff]
    %v1336 = vld [vmem:[%s58 + $0x20] sm:$0xff]
    %v1337 = vld [vmem:[%s58 + $0x28] sm:$0xff]
    %v1338 = vld [vmem:[%s58 + $0x30] sm:$0xff]
    %v1339 = vld [vmem:[%s58 + $0x38] sm:$0xff]
    %v1340 = vld [vmem:[%s58 + $0x40] sm:$0xff]
    %v1341 = vld [vmem:[%s58 + $0x48] sm:$0xff]
    %v1342 = vld [vmem:[%s58 + $0x50] sm:$0xff]
    %v1343 = vld [vmem:[%s58 + $0x58] sm:$0xff]
    %v1344 = vld [vmem:[%s58 + $0x60] sm:$0xff]
    %v1345 = vld [vmem:[%s58 + $0x68] sm:$0xff]
    %v1346 = vld [vmem:[%s58 + $0x70] sm:$0xff]
    %v1347 = vld [vmem:[%s58 + $0x78] sm:$0xff]
    %v1348 = vld [vmem:[%s58 + $0x80] sm:$0xff]
    %v1349 = vld [vmem:[%s58 + $0x88] sm:$0xff]
    %v1350 = vld [vmem:[%s58 + $0x90] sm:$0xff]
    %v1351 = vld [vmem:[%s58 + $0x98] sm:$0xff]
    %v1352 = vld [vmem:[%s58 + $0xa0] sm:$0xff]
    %v1353 = vld [vmem:[%s58 + $0xa8] sm:$0xff]
    %v1354 = vld [vmem:[%s58 + $0xb0] sm:$0xff]
    %v1355 = vld [vmem:[%s58 + $0xb8] sm:$0xff]
    %v1356 = vld [vmem:[%s58 + $0xc0] sm:$0xff]
    %v1357 = vld [vmem:[%s58 + $0xc8] sm:$0xff]
    %v1358 = vld [vmem:[%s58 + $0xd0] sm:$0xff]
    %v1359 = vld [vmem:[%s58 + $0xd8] sm:$0xff]
    %v1360 = vld [vmem:[%s58 + $0xe0] sm:$0xff]
    %v1361 = vld [vmem:[%s58 + $0xe8] sm:$0xff]
    %v1362 = vld [vmem:[%s58 + $0xf0] sm:$0xff]
    %v1363 = vld [vmem:[%s58 + $0xf8] sm:$0xff]
    %v1364 = vld [vmem:[%s58 + $0x100] sm:$0xff]
    %v1365 = vld [vmem:[%s58 + $0x108] sm:$0xff]
    %v1366 = vld [vmem:[%s58 + $0x110] sm:$0xff]
    %v1367 = vld [vmem:[%s58 + $0x118] sm:$0xff]
    %v1368 = vld [vmem:[%s58 + $0x120] sm:$0xff]
    %v1369 = vld [vmem:[%s58 + $0x128] sm:$0xff]
    %v1370 = vld [vmem:[%s58 + $0x130] sm:$0xff]
    %v1371 = vld [vmem:[%s58 + $0x138] sm:$0xff]
    %v1372 = vld [vmem:[%s58 + $0x140] sm:$0xff]
    %v1373 = vld [vmem:[%s58 + $0x148] sm:$0xff]
    %v1374 = vld [vmem:[%s58 + $0x150] sm:$0xff]
    %v1375 = vld [vmem:[%s58 + $0x158] sm:$0xff]
    %v1376 = vld [vmem:[%s58 + $0x160] sm:$0xff]
    %v1377 = vld [vmem:[%s58 + $0x168] sm:$0xff]
    %v1378 = vld [vmem:[%s58 + $0x170] sm:$0xff]
    %v1379 = vld [vmem:[%s58 + $0x178] sm:$0xff]
    %v1380 = vld [vmem:[%s58 + $0x180] sm:$0xff]
    %v1381 = vld [vmem:[%s58 + $0x188] sm:$0xff]
    %v1382 = vld [vmem:[%s58 + $0x190] sm:$0xff]
    %v1383 = vld [vmem:[%s58 + $0x198] sm:$0xff]
    %v1384 = vld [vmem:[%s58 + $0x1a0] sm:$0xff]
    %v1385 = vld [vmem:[%s58 + $0x1a8] sm:$0xff]
    %v1386 = vld [vmem:[%s58 + $0x1b0] sm:$0xff]
    %v1387 = vld [vmem:[%s58 + $0x1b8] sm:$0xff]
    %v1388 = vld [vmem:[%s58 + $0x1c0] sm:$0xff]
    %v1389 = vld [vmem:[%s58 + $0x1c8] sm:$0xff]
    %v1390 = vld [vmem:[%s58 + $0x1d0] sm:$0xff]
    %v1391 = vld [vmem:[%s58 + $0x1d8] sm:$0xff]
    %v1392 = vld [vmem:[%s58 + $0x1e0] sm:$0xff]
    %v1393 = vld [vmem:[%s58 + $0x1e8] sm:$0xff]
    %v1394 = vld [vmem:[%s58 + $0x1f0] sm:$0xff]
    %v1395 = vld [vmem:[%s58 + $0x1f8] sm:$0xff]
    %v1396 = vld [vmem:[#allocation8 + $0xa0] sm:$0xff]
    %v1397 = vld [vmem:[#allocation8 + $0xa8] sm:$0xff]
    %v1398 = vld [vmem:[#allocation8 + $0xb0] sm:$0xff]
    %v1399 = vld [vmem:[#allocation8 + $0xb8] sm:$0xff]
    %v1400 = vperm.slane %v1396, 0
    %v1401 = vperm.slane %v1397, 0
    %v1402 = vperm.slane %v1398, 0
    %v1403 = vperm.slane %v1399, 0
    %v1405 = vunpack.c.l.b16 %v1328
    %v1406 = vunpack.c.h.b16 %v1328
    %v1407 = vpack.c.b16 %v1405, %v1405
    %v1408 = vpack.c.b16 %v1406, %v1406
    %v1475 = vunpack.c.l.b16 %v1332
    %v1476 = vunpack.c.h.b16 %v1332
    %v1477 = vunpack.c.l.b16 %v1333
    %v1478 = vunpack.c.h.b16 %v1333
    %v1479 = vunpack.c.l.b16 %v1334
    %v1480 = vunpack.c.h.b16 %v1334
    %v1481 = vunpack.c.l.b16 %v1335
    %v1482 = vunpack.c.h.b16 %v1335
    %v1483 = vunpack.c.l.b16 %v1336
    %v1484 = vunpack.c.h.b16 %v1336
    %v1485 = vunpack.c.l.b16 %v1337
    %v1486 = vunpack.c.h.b16 %v1337
    %v1487 = vunpack.c.l.b16 %v1338
    %v1488 = vunpack.c.h.b16 %v1338
    %v1489 = vunpack.c.l.b16 %v1339
    %v1490 = vunpack.c.h.b16 %v1339
    %v1491 = vunpack.c.l.b16 %v1340
    %v1492 = vunpack.c.h.b16 %v1340
    %v1493 = vunpack.c.l.b16 %v1341
    %v1494 = vunpack.c.h.b16 %v1341
    %v1495 = vunpack.c.l.b16 %v1342
    %v1496 = vunpack.c.h.b16 %v1342
    %v1497 = vunpack.c.l.b16 %v1343
    %v1498 = vunpack.c.h.b16 %v1343
    %v1499 = vunpack.c.l.b16 %v1344
    %v1500 = vunpack.c.h.b16 %v1344
    %v1501 = vunpack.c.l.b16 %v1345
    %v1502 = vunpack.c.h.b16 %v1345
    %v1503 = vunpack.c.l.b16 %v1346
    %v1504 = vunpack.c.h.b16 %v1346
    %v1505 = vunpack.c.l.b16 %v1347
    %v1506 = vunpack.c.h.b16 %v1347
    %v1507 = vunpack.c.l.b16 %v1348
    %v1508 = vunpack.c.h.b16 %v1348
    %v1509 = vunpack.c.l.b16 %v1349
    %v1510 = vunpack.c.h.b16 %v1349
    %v1511 = vunpack.c.l.b16 %v1350
    %v1512 = vunpack.c.h.b16 %v1350
    %v1513 = vunpack.c.l.b16 %v1351
    %v1514 = vunpack.c.h.b16 %v1351
    %v1515 = vunpack.c.l.b16 %v1352
    %v1516 = vunpack.c.h.b16 %v1352
    %v1517 = vunpack.c.l.b16 %v1353
    %v1518 = vunpack.c.h.b16 %v1353
    %v1519 = vunpack.c.l.b16 %v1354
    %v1520 = vunpack.c.h.b16 %v1354
    %v1521 = vunpack.c.l.b16 %v1355
    %v1522 = vunpack.c.h.b16 %v1355
    %v1523 = vunpack.c.l.b16 %v1356
    %v1524 = vunpack.c.h.b16 %v1356
    %v1525 = vunpack.c.l.b16 %v1357
    %v1526 = vunpack.c.h.b16 %v1357
    %v1527 = vunpack.c.l.b16 %v1358
    %v1528 = vunpack.c.h.b16 %v1358
    %v1529 = vunpack.c.l.b16 %v1359
    %v1530 = vunpack.c.h.b16 %v1359
    %v1531 = vunpack.c.l.b16 %v1360
    %v1532 = vunpack.c.h.b16 %v1360
    %v1533 = vunpack.c.l.b16 %v1361
    %v1534 = vunpack.c.h.b16 %v1361
    %v1535 = vunpack.c.l.b16 %v1362
    %v1536 = vunpack.c.h.b16 %v1362
    %v1537 = vunpack.c.l.b16 %v1363
    %v1538 = vunpack.c.h.b16 %v1363
    %v1539 = vunpack.c.l.b16 %v1364
    %v1540 = vunpack.c.h.b16 %v1364
    %v1541 = vunpack.c.l.b16 %v1365
    %v1542 = vunpack.c.h.b16 %v1365
    %v1543 = vunpack.c.l.b16 %v1366
    %v1544 = vunpack.c.h.b16 %v1366
    %v1545 = vunpack.c.l.b16 %v1367
    %v1546 = vunpack.c.h.b16 %v1367
    %v1547 = vunpack.c.l.b16 %v1368
    %v1548 = vunpack.c.h.b16 %v1368
    %v1549 = vunpack.c.l.b16 %v1369
    %v1550 = vunpack.c.h.b16 %v1369
    %v1551 = vunpack.c.l.b16 %v1370
    %v1552 = vunpack.c.h.b16 %v1370
    %v1553 = vunpack.c.l.b16 %v1371
    %v1554 = vunpack.c.h.b16 %v1371
    %v1555 = vunpack.c.l.b16 %v1372
    %v1556 = vunpack.c.h.b16 %v1372
    %v1557 = vunpack.c.l.b16 %v1373
    %v1558 = vunpack.c.h.b16 %v1373
    %v1559 = vunpack.c.l.b16 %v1374
    %v1560 = vunpack.c.h.b16 %v1374
    %v1561 = vunpack.c.l.b16 %v1375
    %v1562 = vunpack.c.h.b16 %v1375
    %v1563 = vunpack.c.l.b16 %v1376
    %v1564 = vunpack.c.h.b16 %v1376
    %v1565 = vunpack.c.l.b16 %v1377
    %v1566 = vunpack.c.h.b16 %v1377
    %v1567 = vunpack.c.l.b16 %v1378
    %v1568 = vunpack.c.h.b16 %v1378
    %v1569 = vunpack.c.l.b16 %v1379
    %v1570 = vunpack.c.h.b16 %v1379
    %v1571 = vunpack.c.l.b16 %v1380
    %v1572 = vunpack.c.h.b16 %v1380
    %v1573 = vunpack.c.l.b16 %v1381
    %v1574 = vunpack.c.h.b16 %v1381
    %v1575 = vunpack.c.l.b16 %v1382
    %v1576 = vunpack.c.h.b16 %v1382
    %v1577 = vunpack.c.l.b16 %v1383
    %v1578 = vunpack.c.h.b16 %v1383
    %v1579 = vunpack.c.l.b16 %v1384
    %v1580 = vunpack.c.h.b16 %v1384
    %v1581 = vunpack.c.l.b16 %v1385
    %v1582 = vunpack.c.h.b16 %v1385
    %v1583 = vunpack.c.l.b16 %v1386
    %v1584 = vunpack.c.h.b16 %v1386
    %v1585 = vunpack.c.l.b16 %v1387
    %v1586 = vunpack.c.h.b16 %v1387
    %v1587 = vunpack.c.l.b16 %v1388
    %v1588 = vunpack.c.h.b16 %v1388
    %v1589 = vunpack.c.l.b16 %v1389
    %v1590 = vunpack.c.h.b16 %v1389
    %v1591 = vunpack.c.l.b16 %v1390
    %v1592 = vunpack.c.h.b16 %v1390
    %v1593 = vunpack.c.l.b16 %v1391
    %v1594 = vunpack.c.h.b16 %v1391
    %v1595 = vunpack.c.l.b16 %v1392
    %v1596 = vunpack.c.h.b16 %v1392
    %v1597 = vunpack.c.l.b16 %v1393
    %v1598 = vunpack.c.h.b16 %v1393
    %v1599 = vunpack.c.l.b16 %v1394
    %v1600 = vunpack.c.h.b16 %v1394
    %v1601 = vunpack.c.l.b16 %v1395
    %v1602 = vunpack.c.h.b16 %v1395
    %v1603 = vpack.c.b16 %v1479, %v1475
    %v1604 = vpack.c.b16 %v1480, %v1476
    %v1605 = vpack.c.b16 %v1481, %v1477
    %v1606 = vpack.c.b16 %v1482, %v1478
    %v1607 = vpack.c.b16 %v1487, %v1483
    %v1608 = vpack.c.b16 %v1488, %v1484
    %v1609 = vpack.c.b16 %v1489, %v1485
    %v1610 = vpack.c.b16 %v1490, %v1486
    %v1611 = vpack.c.b16 %v1495, %v1491
    %v1612 = vpack.c.b16 %v1496, %v1492
    %v1613 = vpack.c.b16 %v1497, %v1493
    %v1614 = vpack.c.b16 %v1498, %v1494
    %v1615 = vpack.c.b16 %v1503, %v1499
    %v1616 = vpack.c.b16 %v1504, %v1500
    %v1617 = vpack.c.b16 %v1505, %v1501
    %v1618 = vpack.c.b16 %v1506, %v1502
    %v1619 = vpack.c.b16 %v1511, %v1507
    %v1620 = vpack.c.b16 %v1512, %v1508
    %v1621 = vpack.c.b16 %v1513, %v1509
    %v1622 = vpack.c.b16 %v1514, %v1510
    %v1623 = vpack.c.b16 %v1519, %v1515
    %v1624 = vpack.c.b16 %v1520, %v1516
    %v1625 = vpack.c.b16 %v1521, %v1517
    %v1626 = vpack.c.b16 %v1522, %v1518
    %v1627 = vpack.c.b16 %v1527, %v1523
    %v1628 = vpack.c.b16 %v1528, %v1524
    %v1629 = vpack.c.b16 %v1529, %v1525
    %v1630 = vpack.c.b16 %v1530, %v1526
    %v1631 = vpack.c.b16 %v1535, %v1531
    %v1632 = vpack.c.b16 %v1536, %v1532
    %v1633 = vpack.c.b16 %v1537, %v1533
    %v1634 = vpack.c.b16 %v1538, %v1534
    %v1635 = vpack.c.b16 %v1543, %v1539
    %v1636 = vpack.c.b16 %v1544, %v1540
    %v1637 = vpack.c.b16 %v1545, %v1541
    %v1638 = vpack.c.b16 %v1546, %v1542
    %v1639 = vpack.c.b16 %v1551, %v1547
    %v1640 = vpack.c.b16 %v1552, %v1548
    %v1641 = vpack.c.b16 %v1553, %v1549
    %v1642 = vpack.c.b16 %v1554, %v1550
    %v1643 = vpack.c.b16 %v1559, %v1555
    %v1644 = vpack.c.b16 %v1560, %v1556
    %v1645 = vpack.c.b16 %v1561, %v1557
    %v1646 = vpack.c.b16 %v1562, %v1558
    %v1647 = vpack.c.b16 %v1567, %v1563
    %v1648 = vpack.c.b16 %v1568, %v1564
    %v1649 = vpack.c.b16 %v1569, %v1565
    %v1650 = vpack.c.b16 %v1570, %v1566
    %v1651 = vpack.c.b16 %v1575, %v1571
    %v1652 = vpack.c.b16 %v1576, %v1572
    %v1653 = vpack.c.b16 %v1577, %v1573
    %v1654 = vpack.c.b16 %v1578, %v1574
    %v1655 = vpack.c.b16 %v1583, %v1579
    %v1656 = vpack.c.b16 %v1584, %v1580
    %v1657 = vpack.c.b16 %v1585, %v1581
    %v1658 = vpack.c.b16 %v1586, %v1582
    %v1659 = vpack.c.b16 %v1591, %v1587
    %v1660 = vpack.c.b16 %v1592, %v1588
    %v1661 = vpack.c.b16 %v1593, %v1589
    %v1662 = vpack.c.b16 %v1594, %v1590
    %v1663 = vpack.c.b16 %v1599, %v1595
    %v1664 = vpack.c.b16 %v1600, %v1596
    %v1665 = vpack.c.b16 %v1601, %v1597
    %v1666 = vpack.c.b16 %v1602, %v1598
    %1731 = vmatpush.bf16.msra.mxu0 %v1631
    %1732 = vmatpush.bf16.msra.mxu0 %v1627
    %1733 = vmatpush.bf16.msra.mxu0 %v1623
    %1734 = vmatpush.bf16.msra.mxu0 %v1619
    %1735 = vmatpush.bf16.msra.mxu0 %v1615
    %1736 = vmatpush.bf16.msra.mxu0 %v1611
    %1737 = vmatpush.bf16.msra.mxu0 %v1607
    %1738 = vmatpush.bf16.msra.mxu0 %v1603
    %1739 = vmatmul.bf16.gmra.mxu0 %v1407
    %v1740 = vpop.f32.mrf.mxu0
    %v1741 = vadd.f32 %v1400, %v1740
    %v1742 = vpop.f32.mrf.mxu0
    %1743 = vdwg.mxu0
    %1744 = vmatpush.bf16.msra.mxu0 %v1663
    %1745 = vmatpush.bf16.msra.mxu0 %v1659
    %1746 = vmatpush.bf16.msra.mxu0 %v1655
    %1747 = vmatpush.bf16.msra.mxu0 %v1651
    %1748 = vmatpush.bf16.msra.mxu0 %v1647
    %1749 = vmatpush.bf16.msra.mxu0 %v1643
    %1750 = vmatpush.bf16.msra.mxu0 %v1639
    %1751 = vmatpush.bf16.msra.mxu0 %v1635
    %1752 = vmatmul.bf16.gmra.mxu0 %v1408
    %v1753 = vpop.f32.mrf.mxu0
    %v1754 = vadd.f32 %v1741, %v1753
    %v1755 = vpop.f32.mrf.mxu0
    %1756 = vdwg.mxu0
    %1757 = vmatpush.bf16.msra.mxu0 %v1632
    %1758 = vmatpush.bf16.msra.mxu0 %v1628
    %1759 = vmatpush.bf16.msra.mxu0 %v1624
    %1760 = vmatpush.bf16.msra.mxu0 %v1620
    %1761 = vmatpush.bf16.msra.mxu0 %v1616
    %1762 = vmatpush.bf16.msra.mxu0 %v1612
    %1763 = vmatpush.bf16.msra.mxu0 %v1608
    %1764 = vmatpush.bf16.msra.mxu0 %v1604
    %1765 = vmatmul.bf16.gmra.mxu0 %v1407
    %v1766 = vpop.f32.mrf.mxu0
    %v1767 = vadd.f32 %v1401, %v1766
    %v1768 = vpop.f32.mrf.mxu0
    %1769 = vdwg.mxu0
    %1770 = vmatpush.bf16.msra.mxu0 %v1664
    %1771 = vmatpush.bf16.msra.mxu0 %v1660
    %1772 = vmatpush.bf16.msra.mxu0 %v1656
    %1773 = vmatpush.bf16.msra.mxu0 %v1652
    %1774 = vmatpush.bf16.msra.mxu0 %v1648
    %1775 = vmatpush.bf16.msra.mxu0 %v1644
    %1776 = vmatpush.bf16.msra.mxu0 %v1640
    %1777 = vmatpush.bf16.msra.mxu0 %v1636
    %1778 = vmatmul.bf16.gmra.mxu0 %v1408
    %v1779 = vpop.f32.mrf.mxu0
    %v1780 = vadd.f32 %v1767, %v1779
    %v1781 = vpop.f32.mrf.mxu0
    %1782 = vdwg.mxu0
    %1783 = vmatpush.bf16.msra.mxu0 %v1633
    %1784 = vmatpush.bf16.msra.mxu0 %v1629
    %1785 = vmatpush.bf16.msra.mxu0 %v1625
    %1786 = vmatpush.bf16.msra.mxu0 %v1621
    %1787 = vmatpush.bf16.msra.mxu0 %v1617
    %1788 = vmatpush.bf16.msra.mxu0 %v1613
    %1789 = vmatpush.bf16.msra.mxu0 %v1609
    %1790 = vmatpush.bf16.msra.mxu0 %v1605
    %1791 = vmatmul.bf16.gmra.mxu0 %v1407
    %v1792 = vpop.f32.mrf.mxu0
    %v1793 = vadd.f32 %v1402, %v1792
    %v1794 = vpop.f32.mrf.mxu0
    %1795 = vdwg.mxu0
    %1796 = vmatpush.bf16.msra.mxu0 %v1665
    %1797 = vmatpush.bf16.msra.mxu0 %v1661
    %1798 = vmatpush.bf16.msra.mxu0 %v1657
    %1799 = vmatpush.bf16.msra.mxu0 %v1653
    %1800 = vmatpush.bf16.msra.mxu0 %v1649
    %1801 = vmatpush.bf16.msra.mxu0 %v1645
    %1802 = vmatpush.bf16.msra.mxu0 %v1641
    %1803 = vmatpush.bf16.msra.mxu0 %v1637
    %1804 = vmatmul.bf16.gmra.mxu0 %v1408
    %v1805 = vpop.f32.mrf.mxu0
    %v1806 = vadd.f32 %v1793, %v1805
    %v1807 = vpop.f32.mrf.mxu0
    %1808 = vdwg.mxu0
    %1809 = vmatpush.bf16.msra.mxu0 %v1634
    %1810 = vmatpush.bf16.msra.mxu0 %v1630
    %1811 = vmatpush.bf16.msra.mxu0 %v1626
    %1812 = vmatpush.bf16.msra.mxu0 %v1622
    %1813 = vmatpush.bf16.msra.mxu0 %v1618
    %1814 = vmatpush.bf16.msra.mxu0 %v1614
    %1815 = vmatpush.bf16.msra.mxu0 %v1610
    %1816 = vmatpush.bf16.msra.mxu0 %v1606
    %1817 = vmatmul.bf16.gmra.mxu0 %v1407
    %v1818 = vpop.f32.mrf.mxu0
    %v1819 = vadd.f32 %v1403, %v1818
    %v1820 = vpop.f32.mrf.mxu0
    %1821 = vdwg.mxu0
    %1822 = vmatpush.bf16.msra.mxu0 %v1666
    %1823 = vmatpush.bf16.msra.mxu0 %v1662
    %1824 = vmatpush.bf16.msra.mxu0 %v1658
    %1825 = vmatpush.bf16.msra.mxu0 %v1654
    %1826 = vmatpush.bf16.msra.mxu0 %v1650
    %1827 = vmatpush.bf16.msra.mxu0 %v1646
    %1828 = vmatpush.bf16.msra.mxu0 %v1642
    %1829 = vmatpush.bf16.msra.mxu0 %v1638
    %1830 = vmatmul.bf16.gmra.mxu0 %v1408
    %v1831 = vpop.f32.mrf.mxu0
    %v1832 = vadd.f32 %v1819, %v1831
    %v1833 = vpop.f32.mrf.mxu0
    %1834 = vdwg.mxu0
    %1835 = vst [vmem:[#allocation10] sm:$0xff] %v1754
    %1836 = vst [vmem:[#allocation10 + $0x8] sm:$0xff] %v1780
    %1837 = vst [vmem:[#allocation10 + $0x10] sm:$0xff] %v1806
    %1838 = vst [vmem:[#allocation10 + $0x18] sm:$0xff] %v1832
    // Predicated region
    $region22: #{tpu_custom_call.1} parent=1 // pred_check
      _
    $region23: #{tpu_custom_call.1} parent=1 // pred_check_branch
      %1840 = sbr.rel (0) target = $region25
    $region24: #{tpu_custom_call.1} parent=1 // pred_region
      %1842 = vsyncadd [#allocation7], 0
      %s1844 = sshll.u32 [#allocation10], 4
      %s1845 = int_to_ptr.vmem [resolvable:$true] %s1844
      %s1846 = sshll.u32 %s8, 4
      %s1847 = int_to_ptr.hbm [resolvable:$true] %s1846
      %1849 = dma.vmem_to_hbm [thread:$0]  %s1845, 512, %s1847, [#allocation7]
    $region25: #{tpu_custom_call.1} parent=1 // pred_fallthru
      _
    // Predicated region
    $region26: #{tpu_custom_call.1} parent=1 // pred_check
      _
    $region27: #{tpu_custom_call.1} parent=1 // pred_check_branch
      %1851 = sbr.rel (0) target = $region29
    $region28: #{tpu_custom_call.1} parent=1 // pred_region
      %1853 = dma.done [#allocation7], 512
    $region29: #{tpu_custom_call.1} parent=1 // pred_fallthru
      _
    %1854 = vsyncpa [#allocation6], 1
    %1855 = vsyncpa [#allocation9], 1
    %1856 = vsyncpa [#allocation7], 1
  %1857 = vsyncmov [#allocation4]
  %s1858 = vpop.sfrf %1857
  %p1859 = scmp.eq.s32.totalorder %s1858, 0
  %p1860 = pneg %p1859
  %1862 = shalt.err (%p1860)
  %s1863 = scalar_lea.sflag [#allocation4], 1
  %1864 = vsyncmov %s1863
  %s1865 = vpop.sfrf %1864
  %p1866 = scmp.eq.s32.totalorder %s1865, 0
  %p1867 = pneg %p1866
  %1869 = shalt.err (%p1867)

</llo_original>
